<compile_context>
chip_gen: v7x
topology: tpu7x:2x2x1
jax: 0.10.0
libtpu: 0.0.40
codegen_flags: <defaults>
</compile_context>

<pallas_src>
import functools

import jax
import jax.numpy as jnp
from jax.experimental import pallas as pl
from jax.experimental.pallas import tpu as pltpu


LANE = 128
_MAX_TILE_T = 1024   # amortizes the ~0.35us/grid-step overhead; a few MiB of VMEM live


def _round_up(n, m):
    return ((n + m - 1) // m) * m


def _pad_cols(x, cols):
    pad = cols - x.shape[1]
    return x if pad == 0 else jnp.pad(x, ((0, 0), (0, pad)))


def _default_tile_t(T):
    if T <= _MAX_TILE_T:
        return T               # one block; block dims equal the full array dims
    return _MAX_TILE_T         # grid >= 2 -> both v7x TensorCores get work


# ---------------------------------------------------------------------------
# One-time parameter repacking (hoisted out of the per-call path).
# ---------------------------------------------------------------------------
def pack_feats_biaffine_params(params):
    """Run once; reuse the result across forward calls."""
    E, M = params['wm'].shape
    L = params['A'].shape[0]
    Lp = _round_up(L, LANE)                      # lane-dense output slab (>= 128 lanes)

    # A[l, m1, m2] -> A2[m1, l*M + m2]
    a2 = jnp.transpose(params['A'], (1, 0, 2)).reshape(M, L * M).astype(jnp.bfloat16)
    # group-sum selector: sel[l*M + m2, l'] = 1 iff l == l'  (padded columns are 0)
    sel = jnp.kron(jnp.eye(L, Lp, dtype=jnp.float32), jnp.ones((M, 1), jnp.float32))
    bx = _pad_cols(params['bx'].astype(jnp.float32), Lp)
    bz = _pad_cols(params['bz'].astype(jnp.float32), Lp)
    # fused [sel ; bx ; bz]: selector + bias_x + bias_y become a single MXU dot
    w2 = jnp.concatenate([sel, bx, bz], axis=0).astype(jnp.bfloat16)     # [L*M+2M, Lp]

    return {
        'wm': params['wm'].astype(jnp.bfloat16),                          # [E, M]
        'bm': params['bm'].reshape(1, M).astype(jnp.float32),             # [1, M]
        'a2': a2,                                                         # [M, L*M]
        'w2': w2,                                                         # [L*M+2M, Lp]
        'b0': _pad_cols(params['b0'].reshape(1, L).astype(jnp.float32), Lp),  # [1, Lp]
    }


# ---------------------------------------------------------------------------
# Pallas kernel: fused MLP + biaffine bilinear scoring for one token tile.
# ---------------------------------------------------------------------------
def _feats_biaffine_kernel(num_labels, bf16_elementwise,
                           h_ref, z_ref, wm_ref, bm_ref, a2_ref, w2_ref, b0_ref,
                           out_ref):
    # MLP: x = relu(h @ Wm + bm) — activations cast to bf16 right before the MXU,
    # f32 accumulation.
    hb = h_ref[...].astype(jnp.bfloat16)
    x = jnp.dot(hb, wm_ref[...], preferred_element_type=jnp.float32) + bm_ref[...]
    x = jnp.maximum(x, 0.0)                                    # [tt, M] f32
    xb = x.astype(jnp.bfloat16)
    zb = z_ref[...].astype(jnp.bfloat16)                       # [tt, M]

    # Bilinear term without a per-label loop:
    #   xa[t, l*M + m2] = sum_m1 x[t, m1] * A[l, m1, m2]
    xa = jnp.dot(xb, a2_ref[...], preferred_element_type=jnp.float32)    # [tt, L*M]
    if bf16_elementwise:        # v6e/v7x: packed-bf16 VALU, halves vreg footprint
        prod = xa.astype(jnp.bfloat16) * jnp.tile(zb, (1, num_labels))
    else:                       # v5e: no bf16 VALU — keep the product in f32
        ztile = jnp.tile(z_ref[...].astype(jnp.float32), (1, num_labels))
        prod = (xa * ztile).astype(jnp.bfloat16)

    # One fused MXU push for (selector group-sum + bias_x + bias_y), then + b0:
    #   [prod | x | z] @ [sel ; bx ; bz]   (K = L*M + 2M)
    cat = jnp.concatenate([prod, xb, zb], axis=-1)             # [tt, L*M + 2M] bf16
    scores = jnp.dot(cat, w2_ref[...],
                     preferred_element_type=jnp.float32) + b0_ref[...]   # [tt, Lp]
    out_ref[...] = scores.astype(out_ref.dtype)


# ---------------------------------------------------------------------------
# Wrapper: FeatsBiaffine.forward / parse
# ---------------------------------------------------------------------------
def feats_biaffine_forward(h, upos_embedding, packed, *, tile_t=None,
                           out_dtype=jnp.bfloat16, bf16_elementwise=True):
    """FeatsBiaffine.forward(h, upos_embedding) -> scores [T, L]."""
    T, E = h.shape
    M = packed['wm'].shape[1]
    L = packed['a2'].shape[1] // M
    Lp = packed['w2'].shape[1]
    assert packed['wm'].shape[0] == E
    assert upos_embedding.shape == (T, M)

    if tile_t is None:
        tile_t = _default_tile_t(T)
    tile_t = min(tile_t, T)
    # multiple of 16 keeps the in-kernel bf16 tiles sublane-dense; a single
    # full-extent block (tile_t == T) is always legal regardless of alignment.
    assert tile_t == T or tile_t % 16 == 0

    resident = lambda i: (0, 0)        # weights stay VMEM-resident across the grid

    out = pl.pallas_call(
        functools.partial(_feats_biaffine_kernel, L, bf16_elementwise),
        out_shape=jax.ShapeDtypeStruct((T, Lp), out_dtype),
        grid=(pl.cdiv(T, tile_t),),
        in_specs=[
            pl.BlockSpec((tile_t, E), lambda i: (i, 0)),       # h tile (pipelined)
            pl.BlockSpec((tile_t, M), lambda i: (i, 0)),       # upos-embedding tile
            pl.BlockSpec((E, M), resident),                    # Wm
            pl.BlockSpec((1, M), resident),                    # bm
            pl.BlockSpec((M, L * M), resident),                # A (re-laid-out)
            pl.BlockSpec((L * M + 2 * M, Lp), resident),       # fused [sel ; bx ; bz]
            pl.BlockSpec((1, Lp), resident),                   # scalar bias b0
        ],
        out_specs=pl.BlockSpec((tile_t, Lp), lambda i: (i, 0)),
        compiler_params=pltpu.CompilerParams(
            dimension_semantics=("parallel",)),                # megacore over tokens
    )(h, upos_embedding, packed['wm'], packed['bm'], packed['a2'],
      packed['w2'], packed['b0'])

    return out[:, :L]


def feats_biaffine_parse(h, upos_embedding, packed, **kw):
    """FeatsBiaffine.parse(): argmax over the label axis."""
    return jnp.argmax(feats_biaffine_forward(h, upos_embedding, packed, **kw), axis=1)


# ---------------------------------------------------------------------------
# Pure-JAX reference (f32) for correctness checking.
# ---------------------------------------------------------------------------
def feats_biaffine_reference(h, upos_embedding, params):
    x = jnp.maximum(h @ params['wm'] + params['bm'], 0.0)
    bil = jnp.einsum('tm,lmn,tn->tl', x, params['A'], upos_embedding)
    return bil + x @ params['bx'] + upos_embedding @ params['bz'] + params['b0']


# ---------------------------------------------------------------------------
if __name__ == "__main__":
    # Shapes consistent with the tagger context:
    #   input_dim = 2 * lstm_hidden = 128, mlp_dim = 32, labels_dim = 8.
    E, M, L = 128, 32, 8
    key = jax.random.PRNGKey(0)
    key, k1, k2, k3, k4, k5, k6 = jax.random.split(key, 7)
    scale = 0.1
    params = {
        'wm': scale * jax.random.normal(k1, (E, M), jnp.float32),
        'bm': scale * jax.random.normal(k2, (M,), jnp.float32),
        'A':  scale * jax.random.normal(k3, (L, M, M), jnp.float32),
        'bx': scale * jax.random.normal(k4, (M, L), jnp.float32),
        'bz': scale * jax.random.normal(k5, (M, L), jnp.float32),
        'b0': scale * jax.random.normal(k6, (L,), jnp.float32),
    }
    packed = pack_feats_biaffine_params(params)     # one-time repack, reused below
    fwd = jax.jit(functools.partial(feats_biaffine_forward, packed=packed))

    # T = 250 exercises the single full-extent-block path; T = 2500 the multi-block
    # grid with a ragged last block (no host-side padding of h / upos_embedding).
    for T in (250, 2500):
        key, kh, kz = jax.random.split(key, 3)
        h = scale * jax.random.normal(kh, (T, E), jnp.float32)
        upos_emb = scale * jax.random.normal(kz, (T, M), jnp.float32)

        scores = fwd(h, upos_emb)
        jax.block_until_ready(scores)
        assert scores.shape == (T, L)
        scores_f32 = scores.astype(jnp.float32)
        # finiteness checked only on the sliced (in-bounds) output
        assert bool(jnp.all(jnp.isfinite(scores_f32)))

        ref = feats_biaffine_reference(h, upos_emb, params)
        max_err = float(jnp.max(jnp.abs(scores_f32 - ref)))
        assert max_err < 3e-2, f"T={T}: max abs err {max_err}"   # bf16 tolerance

        preds = feats_biaffine_parse(h, upos_emb, packed)        # FeatsBiaffine.parse()
        assert preds.shape == (T,)

    print("KERNEL_OK")
</pallas_src>

<mosaic_0001>
module attributes {stable_mosaic.version = 11 : i64} {
  func.func @_feats_biaffine_kernel(%arg0: i32, %arg1: memref<250x128xf32, #tpu.memory_space<vmem>>, %arg2: memref<250x32xf32, #tpu.memory_space<vmem>>, %arg3: memref<128x32xbf16, #tpu.memory_space<vmem>>, %arg4: memref<1x32xf32, #tpu.memory_space<vmem>>, %arg5: memref<32x256xbf16, #tpu.memory_space<vmem>>, %arg6: memref<320x128xbf16, #tpu.memory_space<vmem>>, %arg7: memref<1x128xf32, #tpu.memory_space<vmem>>, %arg8: memref<250x128xbf16, #tpu.memory_space<vmem>>) attributes {dimension_semantics = [#tpu.dimension_semantics<parallel>], iteration_bounds = array<i64: 1>, scalar_prefetch = 0 : i64, scratch_operands = 0 : i64, tpu.core_type = #tpu.core_type<tc>, window_params = [{transform_indices = @transform_0, window_bounds = array<i64: 250, 128>}, {transform_indices = @transform_1, window_bounds = array<i64: 250, 32>}, {pipeline_mode = #tpu.pipeline_mode<synchronous>, transform_indices = @transform_2, window_bounds = array<i64: 128, 32>}, {pipeline_mode = #tpu.pipeline_mode<synchronous>, transform_indices = @transform_3, window_bounds = array<i64: 1, 32>}, {pipeline_mode = #tpu.pipeline_mode<synchronous>, transform_indices = @transform_4, window_bounds = array<i64: 32, 256>}, {pipeline_mode = #tpu.pipeline_mode<synchronous>, transform_indices = @transform_5, window_bounds = array<i64: 320, 128>}, {pipeline_mode = #tpu.pipeline_mode<synchronous>, transform_indices = @transform_6, window_bounds = array<i64: 1, 128>}, {transform_indices = @transform_7, window_bounds = array<i64: 250, 128>}]} {
    %c0 = arith.constant 0 : index
    %c0_0 = arith.constant 0 : index
    %0 = vector.load %arg1[%c0, %c0_0] : memref<250x128xf32, #tpu.memory_space<vmem>>, vector<250x128xf32>
    %1 = arith.truncf %0 : vector<250x128xf32> to vector<250x128xbf16>
    %c0_1 = arith.constant 0 : index
    %c0_2 = arith.constant 0 : index
    %2 = vector.load %arg3[%c0_1, %c0_2] : memref<128x32xbf16, #tpu.memory_space<vmem>>, vector<128x32xbf16>
    %cst = arith.constant dense<0.000000e+00> : vector<250x32xf32>
    %3 = tpu.matmul %1, %2, %cst {dimension_numbers = #tpu.dot_dimension_numbers<[1], [0], [0], [1], [0, 0, 1, 1], [], []>} : vector<250x128xbf16>, vector<128x32xbf16>, vector<250x32xf32> -> vector<250x32xf32>
    %c0_3 = arith.constant 0 : index
    %c0_4 = arith.constant 0 : index
    %4 = vector.load %arg4[%c0_3, %c0_4] : memref<1x32xf32, #tpu.memory_space<vmem>>, vector<1x32xf32>
    %5 = vector.broadcast %4 : vector<1x32xf32> to vector<250x32xf32>
    %6 = arith.addf %3, %5 : vector<250x32xf32>
    %cst_5 = arith.constant 0.000000e+00 : f32
    %7 = vector.broadcast %cst_5 : f32 to vector<250x32xf32>
    %8 = arith.maximumf %6, %7 : vector<250x32xf32>
    %9 = arith.truncf %8 : vector<250x32xf32> to vector<250x32xbf16>
    %c0_6 = arith.constant 0 : index
    %c0_7 = arith.constant 0 : index
    %10 = vector.load %arg2[%c0_6, %c0_7] : memref<250x32xf32, #tpu.memory_space<vmem>>, vector<250x32xf32>
    %11 = arith.truncf %10 : vector<250x32xf32> to vector<250x32xbf16>
    %c0_8 = arith.constant 0 : index
    %c0_9 = arith.constant 0 : index
    %12 = vector.load %arg5[%c0_8, %c0_9] : memref<32x256xbf16, #tpu.memory_space<vmem>>, vector<32x256xbf16>
    %cst_10 = arith.constant dense<0.000000e+00> : vector<250x256xf32>
    %13 = tpu.matmul %9, %12, %cst_10 {dimension_numbers = #tpu.dot_dimension_numbers<[1], [0], [0], [1], [0, 0, 1, 1], [], []>} : vector<250x32xbf16>, vector<32x256xbf16>, vector<250x256xf32> -> vector<250x256xf32>
    %14 = arith.truncf %13 : vector<250x256xf32> to vector<250x256xbf16>
    %15 = tpu.concatenate %11, %11, %11, %11, %11, %11, %11, %11 in 1 : vector<250x32xbf16>, vector<250x32xbf16>, vector<250x32xbf16>, vector<250x32xbf16>, vector<250x32xbf16>, vector<250x32xbf16>, vector<250x32xbf16>, vector<250x32xbf16> -> vector<250x256xbf16>
    %16 = arith.mulf %14, %15 : vector<250x256xbf16>
    %17 = tpu.concatenate %16, %9, %11 in 1 : vector<250x256xbf16>, vector<250x32xbf16>, vector<250x32xbf16> -> vector<250x320xbf16>
    %c0_11 = arith.constant 0 : index
    %c0_12 = arith.constant 0 : index
    %18 = vector.load %arg6[%c0_11, %c0_12] : memref<320x128xbf16, #tpu.memory_space<vmem>>, vector<320x128xbf16>
    %cst_13 = arith.constant dense<0.000000e+00> : vector<250x128xf32>
    %19 = tpu.matmul %17, %18, %cst_13 {dimension_numbers = #tpu.dot_dimension_numbers<[1], [0], [0], [1], [0, 0, 1, 1], [], []>} : vector<250x320xbf16>, vector<320x128xbf16>, vector<250x128xf32> -> vector<250x128xf32>
    %c0_14 = arith.constant 0 : index
    %c0_15 = arith.constant 0 : index
    %20 = vector.load %arg7[%c0_14, %c0_15] : memref<1x128xf32, #tpu.memory_space<vmem>>, vector<1x128xf32>
    %21 = vector.broadcast %20 : vector<1x128xf32> to vector<250x128xf32>
    %22 = arith.addf %19, %21 : vector<250x128xf32>
    %23 = arith.truncf %22 : vector<250x128xf32> to vector<250x128xbf16>
    %c0_16 = arith.constant 0 : index
    %c0_17 = arith.constant 0 : index
    %24 = vector.load %arg8[%c0_16, %c0_17] : memref<250x128xbf16, #tpu.memory_space<vmem>>, vector<250x128xbf16>
    tpu.vector_store %arg8[%c0_16, %c0_17], %23 {strides = array<i32>} : memref<250x128xbf16, #tpu.memory_space<vmem>>, vector<250x128xbf16>,
    return
  }
  func.func @transform_0(%arg0: i32) -> (i32, i32) {
    %c0_i32 = arith.constant 0 : i32
    %c0_i32_0 = arith.constant 0 : i32
    return %arg0, %c0_i32 : i32, i32
  }
  func.func @transform_1(%arg0: i32) -> (i32, i32) {
    %c0_i32 = arith.constant 0 : i32
    %c0_i32_0 = arith.constant 0 : i32
    return %arg0, %c0_i32 : i32, i32
  }
  func.func @transform_2(%arg0: i32) -> (i32, i32) {
    %c0_i32 = arith.constant 0 : i32
    %c0_i32_0 = arith.constant 0 : i32
    %c0_i32_1 = arith.constant 0 : i32
    return %c0_i32, %c0_i32_0 : i32, i32
  }
  func.func @transform_3(%arg0: i32) -> (i32, i32) {
    %c0_i32 = arith.constant 0 : i32
    %c0_i32_0 = arith.constant 0 : i32
    %c0_i32_1 = arith.constant 0 : i32
    return %c0_i32, %c0_i32_0 : i32, i32
  }
  func.func @transform_4(%arg0: i32) -> (i32, i32) {
    %c0_i32 = arith.constant 0 : i32
    %c0_i32_0 = arith.constant 0 : i32
    %c0_i32_1 = arith.constant 0 : i32
    return %c0_i32, %c0_i32_0 : i32, i32
  }
  func.func @transform_5(%arg0: i32) -> (i32, i32) {
    %c0_i32 = arith.constant 0 : i32
    %c0_i32_0 = arith.constant 0 : i32
    %c0_i32_1 = arith.constant 0 : i32
    return %c0_i32, %c0_i32_0 : i32, i32
  }
  func.func @transform_6(%arg0: i32) -> (i32, i32) {
    %c0_i32 = arith.constant 0 : i32
    %c0_i32_0 = arith.constant 0 : i32
    %c0_i32_1 = arith.constant 0 : i32
    return %c0_i32, %c0_i32_0 : i32, i32
  }
  func.func @transform_7(%arg0: i32) -> (i32, i32) {
    %c0_i32 = arith.constant 0 : i32
    %c0_i32_0 = arith.constant 0 : i32
    return %arg0, %c0_i32 : i32, i32
  }
}

</mosaic_0001>

<llo_original>
// kernel: feats_biaffine_forward.1
$region0: #{feats_biaffine_forward.1}
  #allocation0 [shape = 'u32[]', space=smem, size = 0x4, offset = 0x4, fixed_abs, tag = 'smem constant byte address 0x4 - core index']
  #allocation1 [shape = 'u32[144,128]{1,0:T(1,128)}', space=vmem, size = 0x12000, scoped, tag = 'internal scratch']
  %s0 = inlined_call_operand.vmem [shape: f32[250,128], index: 0, kind: input, shape index: {}]
  %s1 = inlined_call_operand.vmem [shape: f32[250,32], index: 1, kind: input, shape index: {}]
  %s2 = inlined_call_operand.vmem [shape: bf16[128,32], index: 2, kind: input, shape index: {}]
  %s3 = inlined_call_operand.vmem [shape: f32[1,32], index: 3, kind: input, shape index: {}]
  %s4 = inlined_call_operand.vmem [shape: bf16[32,256], index: 4, kind: input, shape index: {}]
  %s5 = inlined_call_operand.hbm [shape: bf16[320,128], index: 5, kind: input, shape index: {}]
  %s6 = inlined_call_operand.vmem [shape: f32[1,128], index: 6, kind: input, shape index: {}]
  %s7 = inlined_call_operand.vmem [shape: bf16[250,128], index: 7, kind: output, shape index: {}]
  %s8 = sld [smem:[#allocation0]]
  $region42: #{feats_biaffine_forward.1} parent=0
    _
  %s10 = ssub.s32 1, %s8
  %s11 = scalar_select 0, %s10, %s8
  $region1: #{feats_biaffine_forward.1} parent=0
    #allocation2 [shape = 'u8[81920]{0}', space=vmem, size = 0x14000, scoped, tag = 'input window, operand 5, single buffered']
    #allocation3 [shape = 's32[1]{0}', space=sflag, size = 0x4, scoped, tag = 'scoped memory for feats_biaffine_forward.1']
    %12 = vsyncpa [#allocation3], 0
    // Predicated region
    $region2: #{feats_biaffine_forward.1} parent=1 // pred_check
      _
    $region3: #{feats_biaffine_forward.1} parent=1 // pred_check_branch
      %14 = sbr.rel (0) target = $region5
    $region4: #{feats_biaffine_forward.1} parent=1 // pred_region
      _
    $region5: #{feats_biaffine_forward.1} parent=1 // pred_fallthru
      _
    // Predicated region
    $region6: #{feats_biaffine_forward.1} parent=1 // pred_check
      _
    $region7: #{feats_biaffine_forward.1} parent=1 // pred_check_branch
      %16 = sbr.rel (0) target = $region9
    $region8: #{feats_biaffine_forward.1} parent=1 // pred_region
      _
    $region9: #{feats_biaffine_forward.1} parent=1 // pred_fallthru
      _
    // Predicated region
    $region10: #{feats_biaffine_forward.1} parent=1 // pred_check
      _
    $region11: #{feats_biaffine_forward.1} parent=1 // pred_check_branch
      %18 = sbr.rel (0) target = $region13
    $region12: #{feats_biaffine_forward.1} parent=1 // pred_region
      _
    $region13: #{feats_biaffine_forward.1} parent=1 // pred_fallthru
      _
    // Predicated region
    $region14: #{feats_biaffine_forward.1} parent=1 // pred_check
      _
    $region15: #{feats_biaffine_forward.1} parent=1 // pred_check_branch
      %20 = sbr.rel (0) target = $region17
    $region16: #{feats_biaffine_forward.1} parent=1 // pred_region
      _
    $region17: #{feats_biaffine_forward.1} parent=1 // pred_fallthru
      _
    // Predicated region
    $region18: #{feats_biaffine_forward.1} parent=1 // pred_check
      _
    $region19: #{feats_biaffine_forward.1} parent=1 // pred_check_branch
      %22 = sbr.rel (0) target = $region21
    $region20: #{feats_biaffine_forward.1} parent=1 // pred_region
      _
    $region21: #{feats_biaffine_forward.1} parent=1 // pred_fallthru
      _
    // Predicated region
    $region22: #{feats_biaffine_forward.1} parent=1 // pred_check
      _
    $region23: #{feats_biaffine_forward.1} parent=1 // pred_check_branch
      %24 = sbr.rel (0) target = $region25
    $region24: #{feats_biaffine_forward.1} parent=1 // pred_region
      %s26 = ssub.s32 2560, 2560
      %27 = vsyncadd [#allocation3], %s26
      %s28 = sshll.u32 [#allocation2], 4
      %s29 = int_to_ptr.vmem [resolvable:$true] %s28
      %34 = dma.hbm_to_vmem [thread:$0]  %s5, 2560, %s29, [#allocation3], 64, 64, 4
    $region25: #{feats_biaffine_forward.1} parent=1 // pred_fallthru
      _
    // Predicated region
    $region26: #{feats_biaffine_forward.1} parent=1 // pred_check
      _
    $region27: #{feats_biaffine_forward.1} parent=1 // pred_check_branch
      %36 = sbr.rel (0) target = $region29
    $region28: #{feats_biaffine_forward.1} parent=1 // pred_region
      _
    $region29: #{feats_biaffine_forward.1} parent=1 // pred_fallthru
      _
    // Predicated region
    $region30: #{feats_biaffine_forward.1} parent=1 // pred_check
      _
    $region31: #{feats_biaffine_forward.1} parent=1 // pred_check_branch
      %38 = sbr.rel (0) target = $region33
    $region32: #{feats_biaffine_forward.1} parent=1 // pred_region
      %39 = dma.done [#allocation3], 2560
    $region33: #{feats_biaffine_forward.1} parent=1 // pred_fallthru
      _
    %v41 = vld [vmem:[%s0] sm:$0xff]
    %v42 = vld [vmem:[%s0 + $0x8] sm:$0xff]
    %v43 = vld [vmem:[%s0 + $0x10] sm:$0xff]
    %v44 = vld [vmem:[%s0 + $0x18] sm:$0xff]
    %v45 = vld [vmem:[%s0 + $0x20] sm:$0xff]
    %v46 = vld [vmem:[%s0 + $0x28] sm:$0xff]
    %v47 = vld [vmem:[%s0 + $0x30] sm:$0xff]
    %v48 = vld [vmem:[%s0 + $0x38] sm:$0xff]
    %v49 = vld [vmem:[%s0 + $0x40] sm:$0xff]
    %v50 = vld [vmem:[%s0 + $0x48] sm:$0xff]
    %v51 = vld [vmem:[%s0 + $0x50] sm:$0xff]
    %v52 = vld [vmem:[%s0 + $0x58] sm:$0xff]
    %v53 = vld [vmem:[%s0 + $0x60] sm:$0xff]
    %v54 = vld [vmem:[%s0 + $0x68] sm:$0xff]
    %v55 = vld [vmem:[%s0 + $0x70] sm:$0xff]
    %v56 = vld [vmem:[%s0 + $0x78] sm:$0xff]
    %v57 = vld [vmem:[%s0 + $0x80] sm:$0xff]
    %v58 = vld [vmem:[%s0 + $0x88] sm:$0xff]
    %v59 = vld [vmem:[%s0 + $0x90] sm:$0xff]
    %v60 = vld [vmem:[%s0 + $0x98] sm:$0xff]
    %v61 = vld [vmem:[%s0 + $0xa0] sm:$0xff]
    %v62 = vld [vmem:[%s0 + $0xa8] sm:$0xff]
    %v63 = vld [vmem:[%s0 + $0xb0] sm:$0xff]
    %v64 = vld [vmem:[%s0 + $0xb8] sm:$0xff]
    %v65 = vld [vmem:[%s0 + $0xc0] sm:$0xff]
    %v66 = vld [vmem:[%s0 + $0xc8] sm:$0xff]
    %v67 = vld [vmem:[%s0 + $0xd0] sm:$0xff]
    %v68 = vld [vmem:[%s0 + $0xd8] sm:$0xff]
    %v69 = vld [vmem:[%s0 + $0xe0] sm:$0xff]
    %v70 = vld [vmem:[%s0 + $0xe8] sm:$0xff]
    %v71 = vld [vmem:[%s0 + $0xf0] sm:$0xff]
    %v72 = vld [vmem:[%s0 + $0xf8] sm:$0x3]
    %v73 = vpack.c.bf16 %v42, %v41
    %v74 = vpack.c.bf16 %v44, %v43
    %v75 = vpack.c.bf16 %v46, %v45
    %v76 = vpack.c.bf16 %v48, %v47
    %v77 = vpack.c.bf16 %v50, %v49
    %v78 = vpack.c.bf16 %v52, %v51
    %v79 = vpack.c.bf16 %v54, %v53
    %v80 = vpack.c.bf16 %v56, %v55
    %v81 = vpack.c.bf16 %v58, %v57
    %v82 = vpack.c.bf16 %v60, %v59
    %v83 = vpack.c.bf16 %v62, %v61
    %v84 = vpack.c.bf16 %v64, %v63
    %v85 = vpack.c.bf16 %v66, %v65
    %v86 = vpack.c.bf16 %v68, %v67
    %v87 = vpack.c.bf16 %v70, %v69
    %v88 = vpack.c.bf16 %v72, %v71
    %v89 = vld [vmem:[%s2] sm:$0xf]
    %v90 = vld [vmem:[%s2 + $0x4] sm:$0xf]
    %v91 = vld [vmem:[%s2 + $0x8] sm:$0xf]
    %v92 = vld [vmem:[%s2 + $0xc] sm:$0xf]
    %v93 = vld [vmem:[%s2 + $0x10] sm:$0xf]
    %v94 = vld [vmem:[%s2 + $0x14] sm:$0xf]
    %v95 = vld [vmem:[%s2 + $0x18] sm:$0xf]
    %v96 = vld [vmem:[%s2 + $0x1c] sm:$0xf]
    %v97 = vld [vmem:[%s2 + $0x20] sm:$0xf]
    %v98 = vld [vmem:[%s2 + $0x24] sm:$0xf]
    %v99 = vld [vmem:[%s2 + $0x28] sm:$0xf]
    %v100 = vld [vmem:[%s2 + $0x2c] sm:$0xf]
    %v101 = vld [vmem:[%s2 + $0x30] sm:$0xf]
    %v102 = vld [vmem:[%s2 + $0x34] sm:$0xf]
    %v103 = vld [vmem:[%s2 + $0x38] sm:$0xf]
    %v104 = vld [vmem:[%s2 + $0x3c] sm:$0xf]
    %v105 = vld [vmem:[%s3] sm:$0x1]
    %v107 = vlaneseq
    %v108 = vshrl.u32 %v107, 7
    %v109 = vsub.s32 0, %v108
    %v110 = vrot.slane %v105, %v109
    %v128 = vunpack.c.l.b16 %v89
    %v129 = vunpack.c.l.b16 %v90
    %v130 = vunpack.c.l.b16 %v91
    %v131 = vunpack.c.l.b16 %v92
    %v132 = vunpack.c.l.b16 %v93
    %v133 = vunpack.c.l.b16 %v94
    %v134 = vunpack.c.l.b16 %v95
    %v135 = vunpack.c.l.b16 %v96
    %v136 = vunpack.c.l.b16 %v97
    %v137 = vunpack.c.l.b16 %v98
    %v138 = vunpack.c.l.b16 %v99
    %v139 = vunpack.c.l.b16 %v100
    %v140 = vunpack.c.l.b16 %v101
    %v141 = vunpack.c.l.b16 %v102
    %v142 = vunpack.c.l.b16 %v103
    %v143 = vunpack.c.l.b16 %v104
    %v144 = vpack.c.b16 %v129, %v128
    %v145 = vpack.c.b16 %v131, %v130
    %v146 = vpack.c.b16 %v133, %v132
    %v147 = vpack.c.b16 %v135, %v134
    %v148 = vpack.c.b16 %v137, %v136
    %v149 = vpack.c.b16 %v139, %v138
    %v150 = vpack.c.b16 %v141, %v140
    %v151 = vpack.c.b16 %v143, %v142
    %160 = vmatprep.subr.bf16.mxu0 0
    %161 = vmatpush1.bf16.msra.mxu0 %v144
    %162 = vmatprep.subr.bf16.mxu0 0
    %163 = vmatpush1.bf16.msra.mxu0 %v145
    %164 = vmatprep.subr.bf16.mxu0 0
    %165 = vmatpush1.bf16.msra.mxu0 %v146
    %166 = vmatprep.subr.bf16.mxu0 0
    %167 = vmatpush1.bf16.msra.mxu0 %v147
    %168 = vmatprep.subr.bf16.mxu0 0
    %169 = vmatpush1.bf16.msra.mxu0 %v148
    %170 = vmatprep.subr.bf16.mxu0 0
    %171 = vmatpush1.bf16.msra.mxu0 %v149
    %172 = vmatprep.subr.bf16.mxu0 0
    %173 = vmatpush1.bf16.msra.mxu0 %v150
    %174 = vmatprep.subr.bf16.mxu0 0
    %175 = vmatpush1.bf16.msra.mxu0 %v151
    %176 = vmatprep.subr.bf16.mxu0 0
    %177 = vmatpush1.bf16.msra.mxu0 0
    %178 = vmatprep.subr.bf16.mxu0 0
    %179 = vmatpush1.bf16.msra.mxu0 0
    %180 = vmatprep.subr.bf16.mxu0 0
    %181 = vmatpush1.bf16.msra.mxu0 0
    %182 = vmatprep.subr.bf16.mxu0 0
    %183 = vmatpush1.bf16.msra.mxu0 0
    %184 = vmatprep.subr.bf16.mxu0 0
    %185 = vmatpush1.bf16.msra.mxu0 0
    %186 = vmatprep.subr.bf16.mxu0 0
    %187 = vmatpush1.bf16.msra.mxu0 0
    %188 = vmatprep.subr.bf16.mxu0 0
    %189 = vmatpush1.bf16.msra.mxu0 0
    %190 = vmatprep.subr.bf16.mxu0 0
    %191 = vmatpush1.bf16.msra.mxu0 0
    %192 = vmatprep.mubr.bf16.mxu0 0
    %193 = vmatmul.mubr.bf16.gmra.mrb[0].mxu0 %v73
    %v194 = vpop.f32.mrb[0].mxu0
    %v195 = vadd.f32 %v110, %v194
    %v196 = vpop.f32.mrb[0].mxu0
    %v197 = vpop.f32.mrb[0].mxu0
    %v198 = vadd.f32 %v110, %v197
    %v199 = vpop.f32.mrb[0].mxu0
    %200 = vmatprep.mubr.bf16.mxu0 0
    %201 = vmatmul.mubr.bf16.gmra.mrb[0].mxu0 %v74
    %v202 = vpop.f32.mrb[0].mxu0
    %v203 = vadd.f32 %v110, %v202
    %v204 = vpop.f32.mrb[0].mxu0
    %v205 = vpop.f32.mrb[0].mxu0
    %v206 = vadd.f32 %v110, %v205
    %v207 = vpop.f32.mrb[0].mxu0
    %208 = vmatprep.mubr.bf16.mxu0 0
    %209 = vmatmul.mubr.bf16.gmra.mrb[0].mxu0 %v75
    %v210 = vpop.f32.mrb[0].mxu0
    %v211 = vadd.f32 %v110, %v210
    %v212 = vpop.f32.mrb[0].mxu0
    %v213 = vpop.f32.mrb[0].mxu0
    %v214 = vadd.f32 %v110, %v213
    %v215 = vpop.f32.mrb[0].mxu0
    %216 = vmatprep.mubr.bf16.mxu0 0
    %217 = vmatmul.mubr.bf16.gmra.mrb[0].mxu0 %v76
    %v218 = vpop.f32.mrb[0].mxu0
    %v219 = vadd.f32 %v110, %v218
    %v220 = vpop.f32.mrb[0].mxu0
    %v221 = vpop.f32.mrb[0].mxu0
    %v222 = vadd.f32 %v110, %v221
    %v223 = vpop.f32.mrb[0].mxu0
    %224 = vmatprep.mubr.bf16.mxu0 0
    %225 = vmatmul.mubr.bf16.gmra.mrb[0].mxu0 %v77
    %v226 = vpop.f32.mrb[0].mxu0
    %v227 = vadd.f32 %v110, %v226
    %v228 = vpop.f32.mrb[0].mxu0
    %v229 = vpop.f32.mrb[0].mxu0
    %v230 = vadd.f32 %v110, %v229
    %v231 = vpop.f32.mrb[0].mxu0
    %232 = vmatprep.mubr.bf16.mxu0 0
    %233 = vmatmul.mubr.bf16.gmra.mrb[0].mxu0 %v78
    %v234 = vpop.f32.mrb[0].mxu0
    %v235 = vadd.f32 %v110, %v234
    %v236 = vpop.f32.mrb[0].mxu0
    %v237 = vpop.f32.mrb[0].mxu0
    %v238 = vadd.f32 %v110, %v237
    %v239 = vpop.f32.mrb[0].mxu0
    %240 = vmatprep.mubr.bf16.mxu0 0
    %241 = vmatmul.mubr.bf16.gmra.mrb[0].mxu0 %v79
    %v242 = vpop.f32.mrb[0].mxu0
    %v243 = vadd.f32 %v110, %v242
    %v244 = vpop.f32.mrb[0].mxu0
    %v245 = vpop.f32.mrb[0].mxu0
    %v246 = vadd.f32 %v110, %v245
    %v247 = vpop.f32.mrb[0].mxu0
    %248 = vmatprep.mubr.bf16.mxu0 0
    %249 = vmatmul.mubr.bf16.gmra.mrb[0].mxu0 %v80
    %v250 = vpop.f32.mrb[0].mxu0
    %v251 = vadd.f32 %v110, %v250
    %v252 = vpop.f32.mrb[0].mxu0
    %v253 = vpop.f32.mrb[0].mxu0
    %v254 = vadd.f32 %v110, %v253
    %v255 = vpop.f32.mrb[0].mxu0
    %256 = vmatprep.mubr.bf16.mxu0 0
    %257 = vmatmul.mubr.bf16.gmra.mrb[0].mxu0 %v81
    %v258 = vpop.f32.mrb[0].mxu0
    %v259 = vadd.f32 %v110, %v258
    %v260 = vpop.f32.mrb[0].mxu0
    %v261 = vpop.f32.mrb[0].mxu0
    %v262 = vadd.f32 %v110, %v261
    %v263 = vpop.f32.mrb[0].mxu0
    %264 = vmatprep.mubr.bf16.mxu0 0
    %265 = vmatmul.mubr.bf16.gmra.mrb[0].mxu0 %v82
    %v266 = vpop.f32.mrb[0].mxu0
    %v267 = vadd.f32 %v110, %v266
    %v268 = vpop.f32.mrb[0].mxu0
    %v269 = vpop.f32.mrb[0].mxu0
    %v270 = vadd.f32 %v110, %v269
    %v271 = vpop.f32.mrb[0].mxu0
    %272 = vmatprep.mubr.bf16.mxu0 0
    %273 = vmatmul.mubr.bf16.gmra.mrb[0].mxu0 %v83
    %v274 = vpop.f32.mrb[0].mxu0
    %v275 = vadd.f32 %v110, %v274
    %v276 = vpop.f32.mrb[0].mxu0
    %v277 = vpop.f32.mrb[0].mxu0
    %v278 = vadd.f32 %v110, %v277
    %v279 = vpop.f32.mrb[0].mxu0
    %280 = vmatprep.mubr.bf16.mxu0 0
    %281 = vmatmul.mubr.bf16.gmra.mrb[0].mxu0 %v84
    %v282 = vpop.f32.mrb[0].mxu0
    %v283 = vadd.f32 %v110, %v282
    %v284 = vpop.f32.mrb[0].mxu0
    %v285 = vpop.f32.mrb[0].mxu0
    %v286 = vadd.f32 %v110, %v285
    %v287 = vpop.f32.mrb[0].mxu0
    %288 = vmatprep.mubr.bf16.mxu0 0
    %289 = vmatmul.mubr.bf16.gmra.mrb[0].mxu0 %v85
    %v290 = vpop.f32.mrb[0].mxu0
    %v291 = vadd.f32 %v110, %v290
    %v292 = vpop.f32.mrb[0].mxu0
    %v293 = vpop.f32.mrb[0].mxu0
    %v294 = vadd.f32 %v110, %v293
    %v295 = vpop.f32.mrb[0].mxu0
    %296 = vmatprep.mubr.bf16.mxu0 0
    %297 = vmatmul.mubr.bf16.gmra.mrb[0].mxu0 %v86
    %v298 = vpop.f32.mrb[0].mxu0
    %v299 = vadd.f32 %v110, %v298
    %v300 = vpop.f32.mrb[0].mxu0
    %v301 = vpop.f32.mrb[0].mxu0
    %v302 = vadd.f32 %v110, %v301
    %v303 = vpop.f32.mrb[0].mxu0
    %304 = vmatprep.mubr.bf16.mxu0 0
    %305 = vmatmul.mubr.bf16.gmra.mrb[0].mxu0 %v87
    %v306 = vpop.f32.mrb[0].mxu0
    %v307 = vadd.f32 %v110, %v306
    %v308 = vpop.f32.mrb[0].mxu0
    %v309 = vpop.f32.mrb[0].mxu0
    %v310 = vadd.f32 %v110, %v309
    %v311 = vpop.f32.mrb[0].mxu0
    %312 = vmatprep.mubr.bf16.mxu0 0
    %313 = vmatmul.mubr.bf16.gmra.mrb[0].mxu0 %v88
    %v314 = vpop.f32.mrb[0].mxu0
    %v315 = vadd.f32 %v110, %v314
    %v316 = vpop.f32.mrb[0].mxu0
    %v317 = vpop.f32.mrb[0].mxu0
    %v318 = vadd.f32 %v110, %v317
    %v319 = vpop.f32.mrb[0].mxu0
    %320 = vdwg.mxu0
    %v321 = vmax.f32 %v195, 0.0
    %v322 = vmax.f32 %v198, 0.0
    %v323 = vmax.f32 %v203, 0.0
    %v324 = vmax.f32 %v206, 0.0
    %v325 = vmax.f32 %v211, 0.0
    %v326 = vmax.f32 %v214, 0.0
    %v327 = vmax.f32 %v219, 0.0
    %v328 = vmax.f32 %v222, 0.0
    %v329 = vmax.f32 %v227, 0.0
    %v330 = vmax.f32 %v230, 0.0
    %v331 = vmax.f32 %v235, 0.0
    %v332 = vmax.f32 %v238, 0.0
    %v333 = vmax.f32 %v243, 0.0
    %v334 = vmax.f32 %v246, 0.0
    %v335 = vmax.f32 %v251, 0.0
    %v336 = vmax.f32 %v254, 0.0
    %v337 = vmax.f32 %v259, 0.0
    %v338 = vmax.f32 %v262, 0.0
    %v339 = vmax.f32 %v267, 0.0
    %v340 = vmax.f32 %v270, 0.0
    %v341 = vmax.f32 %v275, 0.0
    %v342 = vmax.f32 %v278, 0.0
    %v343 = vmax.f32 %v283, 0.0
    %v344 = vmax.f32 %v286, 0.0
    %v345 = vmax.f32 %v291, 0.0
    %v346 = vmax.f32 %v294, 0.0
    %v347 = vmax.f32 %v299, 0.0
    %v348 = vmax.f32 %v302, 0.0
    %v349 = vmax.f32 %v307, 0.0
    %v350 = vmax.f32 %v310, 0.0
    %v351 = vmax.f32 %v315, 0.0
    %v352 = vmax.f32 %v318, 0.0
    %v353 = vpack.c.bf16 %v322, %v321
    %v354 = vpack.c.bf16 %v324, %v323
    %v355 = vpack.c.bf16 %v326, %v325
    %v356 = vpack.c.bf16 %v328, %v327
    %v357 = vpack.c.bf16 %v330, %v329
    %v358 = vpack.c.bf16 %v332, %v331
    %v359 = vpack.c.bf16 %v334, %v333
    %v360 = vpack.c.bf16 %v336, %v335
    %v361 = vpack.c.bf16 %v338, %v337
    %v362 = vpack.c.bf16 %v340, %v339
    %v363 = vpack.c.bf16 %v342, %v341
    %v364 = vpack.c.bf16 %v344, %v343
    %v365 = vpack.c.bf16 %v346, %v345
    %v366 = vpack.c.bf16 %v348, %v347
    %v367 = vpack.c.bf16 %v350, %v349
    %v368 = vpack.c.bf16 %v352, %v351
    %v369 = vld [vmem:[%s1] sm:$0xff]
    %v370 = vld [vmem:[%s1 + $0x8] sm:$0xff]
    %v371 = vld [vmem:[%s1 + $0x10] sm:$0xff]
    %v372 = vld [vmem:[%s1 + $0x18] sm:$0xff]
    %v373 = vld [vmem:[%s1 + $0x20] sm:$0xff]
    %v374 = vld [vmem:[%s1 + $0x28] sm:$0xff]
    %v375 = vld [vmem:[%s1 + $0x30] sm:$0xff]
    %v376 = vld [vmem:[%s1 + $0x38] sm:$0xff]
    %v377 = vld [vmem:[%s1 + $0x40] sm:$0xff]
    %v378 = vld [vmem:[%s1 + $0x48] sm:$0xff]
    %v379 = vld [vmem:[%s1 + $0x50] sm:$0xff]
    %v380 = vld [vmem:[%s1 + $0x58] sm:$0xff]
    %v381 = vld [vmem:[%s1 + $0x60] sm:$0xff]
    %v382 = vld [vmem:[%s1 + $0x68] sm:$0xff]
    %v383 = vld [vmem:[%s1 + $0x70] sm:$0xff]
    %v384 = vld [vmem:[%s1 + $0x78] sm:$0xff]
    %v385 = vld [vmem:[%s1 + $0x80] sm:$0xff]
    %v386 = vld [vmem:[%s1 + $0x88] sm:$0xff]
    %v387 = vld [vmem:[%s1 + $0x90] sm:$0xff]
    %v388 = vld [vmem:[%s1 + $0x98] sm:$0xff]
    %v389 = vld [vmem:[%s1 + $0xa0] sm:$0xff]
    %v390 = vld [vmem:[%s1 + $0xa8] sm:$0xff]
    %v391 = vld [vmem:[%s1 + $0xb0] sm:$0xff]
    %v392 = vld [vmem:[%s1 + $0xb8] sm:$0xff]
    %v393 = vld [vmem:[%s1 + $0xc0] sm:$0xff]
    %v394 = vld [vmem:[%s1 + $0xc8] sm:$0xff]
    %v395 = vld [vmem:[%s1 + $0xd0] sm:$0xff]
    %v396 = vld [vmem:[%s1 + $0xd8] sm:$0xff]
    %v397 = vld [vmem:[%s1 + $0xe0] sm:$0xff]
    %v398 = vld [vmem:[%s1 + $0xe8] sm:$0xff]
    %v399 = vld [vmem:[%s1 + $0xf0] sm:$0xff]
    %v400 = vld [vmem:[%s1 + $0xf8] sm:$0x3]
    %v401 = vpack.c.bf16 %v370, %v369
    %v402 = vpack.c.bf16 %v372, %v371
    %v403 = vpack.c.bf16 %v374, %v373
    %v404 = vpack.c.bf16 %v376, %v375
    %v405 = vpack.c.bf16 %v378, %v377
    %v406 = vpack.c.bf16 %v380, %v379
    %v407 = vpack.c.bf16 %v382, %v381
    %v408 = vpack.c.bf16 %v384, %v383
    %v409 = vpack.c.bf16 %v386, %v385
    %v410 = vpack.c.bf16 %v388, %v387
    %v411 = vpack.c.bf16 %v390, %v389
    %v412 = vpack.c.bf16 %v392, %v391
    %v413 = vpack.c.bf16 %v394, %v393
    %v414 = vpack.c.bf16 %v396, %v395
    %v415 = vpack.c.bf16 %v398, %v397
    %v416 = vpack.c.bf16 %v400, %v399
    %v417 = vld [vmem:[%s4] sm:$0xff]
    %v418 = vld [vmem:[%s4 + $0x8] sm:$0xff]
    %v419 = vld [vmem:[%s4 + $0x10] sm:$0xff]
    %v420 = vld [vmem:[%s4 + $0x18] sm:$0xff]
    %v425 = vunpack.c.l.b16 %v417
    %v426 = vunpack.c.h.b16 %v417
    %v427 = vunpack.c.l.b16 %v418
    %v428 = vunpack.c.h.b16 %v418
    %v429 = vunpack.c.l.b16 %v419
    %v430 = vunpack.c.h.b16 %v419
    %v431 = vunpack.c.l.b16 %v420
    %v432 = vunpack.c.h.b16 %v420
    %v433 = vpack.c.b16 %v427, %v425
    %v434 = vpack.c.b16 %v428, %v426
    %v435 = vpack.c.b16 %v431, %v429
    %v436 = vpack.c.b16 %v432, %v430
    %vm441 = vcmask 261120
    %v443 = vsel %vm441, %v353, 0
    %v446 = vsel %vm441, %v354, 0
    %v449 = vsel %vm441, %v355, 0
    %v452 = vsel %vm441, %v356, 0
    %v455 = vsel %vm441, %v357, 0
    %v458 = vsel %vm441, %v358, 0
    %v461 = vsel %vm441, %v359, 0
    %v464 = vsel %vm441, %v360, 0
    %v467 = vsel %vm441, %v361, 0
    %v470 = vsel %vm441, %v362, 0
    %v473 = vsel %vm441, %v363, 0
    %v476 = vsel %vm441, %v364, 0
    %v479 = vsel %vm441, %v365, 0
    %v482 = vsel %vm441, %v366, 0
    %v485 = vsel %vm441, %v367, 0
    %v488 = vsel %vm441, %v368, 0
    %490 = vmatprep.subr.bf16.mxu0 %v434
    %491 = vmatpush1.bf16.msra.mxu0 %v433
    %492 = vmatprep.subr.bf16.mxu0 %v436
    %493 = vmatpush1.bf16.msra.mxu0 %v435
    %494 = vmatprep.subr.bf16.mxu0 0
    %495 = vmatpush1.bf16.msra.mxu0 0
    %496 = vmatprep.subr.bf16.mxu0 0
    %497 = vmatpush1.bf16.msra.mxu0 0
    %498 = vmatprep.subr.bf16.mxu0 0
    %499 = vmatpush1.bf16.msra.mxu0 0
    %500 = vmatprep.subr.bf16.mxu0 0
    %501 = vmatpush1.bf16.msra.mxu0 0
    %502 = vmatprep.subr.bf16.mxu0 0
    %503 = vmatpush1.bf16.msra.mxu0 0
    %504 = vmatprep.subr.bf16.mxu0 0
    %505 = vmatpush1.bf16.msra.mxu0 0
    %506 = vmatprep.subr.bf16.mxu0 0
    %507 = vmatpush1.bf16.msra.mxu0 0
    %508 = vmatprep.subr.bf16.mxu0 0
    %509 = vmatpush1.bf16.msra.mxu0 0
    %510 = vmatprep.subr.bf16.mxu0 0
    %511 = vmatpush1.bf16.msra.mxu0 0
    %512 = vmatprep.subr.bf16.mxu0 0
    %513 = vmatpush1.bf16.msra.mxu0 0
    %514 = vmatprep.subr.bf16.mxu0 0
    %515 = vmatpush1.bf16.msra.mxu0 0
    %516 = vmatprep.subr.bf16.mxu0 0
    %517 = vmatpush1.bf16.msra.mxu0 0
    %518 = vmatprep.subr.bf16.mxu0 0
    %519 = vmatpush1.bf16.msra.mxu0 0
    %520 = vmatprep.subr.bf16.mxu0 0
    %521 = vmatpush1.bf16.msra.mxu0 0
    %522 = vmatprep.mubr.bf16.mxu0 0
    %523 = vmatmul.mubr.bf16.gmra.mrb[0].mxu0 %v443
    %v524 = vpop.f32.mrb[0].mxu0
    %v525 = vadd.f32 0.0, %v524
    %v526 = vpop.f32.mrb[0].mxu0
    %v527 = vadd.f32 0.0, %v526
    %v528 = vpop.f32.mrb[0].mxu0
    %v529 = vadd.f32 0.0, %v528
    %v530 = vpop.f32.mrb[0].mxu0
    %v531 = vadd.f32 0.0, %v530
    %532 = vmatprep.mubr.bf16.mxu0 0
    %533 = vmatmul.mubr.bf16.gmra.mrb[0].mxu0 %v446
    %v534 = vpop.f32.mrb[0].mxu0
    %v535 = vadd.f32 0.0, %v534
    %v536 = vpop.f32.mrb[0].mxu0
    %v537 = vadd.f32 0.0, %v536
    %v538 = vpop.f32.mrb[0].mxu0
    %v539 = vadd.f32 0.0, %v538
    %v540 = vpop.f32.mrb[0].mxu0
    %v541 = vadd.f32 0.0, %v540
    %542 = vmatprep.mubr.bf16.mxu0 0
    %543 = vmatmul.mubr.bf16.gmra.mrb[0].mxu0 %v449
    %v544 = vpop.f32.mrb[0].mxu0
    %v545 = vadd.f32 0.0, %v544
    %v546 = vpop.f32.mrb[0].mxu0
    %v547 = vadd.f32 0.0, %v546
    %v548 = vpop.f32.mrb[0].mxu0
    %v549 = vadd.f32 0.0, %v548
    %v550 = vpop.f32.mrb[0].mxu0
    %v551 = vadd.f32 0.0, %v550
    %552 = vmatprep.mubr.bf16.mxu0 0
    %553 = vmatmul.mubr.bf16.gmra.mrb[0].mxu0 %v452
    %v554 = vpop.f32.mrb[0].mxu0
    %v555 = vadd.f32 0.0, %v554
    %v556 = vpop.f32.mrb[0].mxu0
    %v557 = vadd.f32 0.0, %v556
    %v558 = vpop.f32.mrb[0].mxu0
    %v559 = vadd.f32 0.0, %v558
    %v560 = vpop.f32.mrb[0].mxu0
    %v561 = vadd.f32 0.0, %v560
    %562 = vmatprep.mubr.bf16.mxu0 0
    %563 = vmatmul.mubr.bf16.gmra.mrb[0].mxu0 %v455
    %v564 = vpop.f32.mrb[0].mxu0
    %v565 = vadd.f32 0.0, %v564
    %v566 = vpop.f32.mrb[0].mxu0
    %v567 = vadd.f32 0.0, %v566
    %v568 = vpop.f32.mrb[0].mxu0
    %v569 = vadd.f32 0.0, %v568
    %v570 = vpop.f32.mrb[0].mxu0
    %v571 = vadd.f32 0.0, %v570
    %572 = vmatprep.mubr.bf16.mxu0 0
    %573 = vmatmul.mubr.bf16.gmra.mrb[0].mxu0 %v458
    %v574 = vpop.f32.mrb[0].mxu0
    %v575 = vadd.f32 0.0, %v574
    %v576 = vpop.f32.mrb[0].mxu0
    %v577 = vadd.f32 0.0, %v576
    %v578 = vpop.f32.mrb[0].mxu0
    %v579 = vadd.f32 0.0, %v578
    %v580 = vpop.f32.mrb[0].mxu0
    %v581 = vadd.f32 0.0, %v580
    %582 = vmatprep.mubr.bf16.mxu0 0
    %583 = vmatmul.mubr.bf16.gmra.mrb[0].mxu0 %v461
    %v584 = vpop.f32.mrb[0].mxu0
    %v585 = vadd.f32 0.0, %v584
    %v586 = vpop.f32.mrb[0].mxu0
    %v587 = vadd.f32 0.0, %v586
    %v588 = vpop.f32.mrb[0].mxu0
    %v589 = vadd.f32 0.0, %v588
    %v590 = vpop.f32.mrb[0].mxu0
    %v591 = vadd.f32 0.0, %v590
    %592 = vmatprep.mubr.bf16.mxu0 0
    %593 = vmatmul.mubr.bf16.gmra.mrb[0].mxu0 %v464
    %v594 = vpop.f32.mrb[0].mxu0
    %v595 = vadd.f32 0.0, %v594
    %v596 = vpop.f32.mrb[0].mxu0
    %v597 = vadd.f32 0.0, %v596
    %v598 = vpop.f32.mrb[0].mxu0
    %v599 = vadd.f32 0.0, %v598
    %v600 = vpop.f32.mrb[0].mxu0
    %v601 = vadd.f32 0.0, %v600
    %602 = vmatprep.mubr.bf16.mxu0 0
    %603 = vmatmul.mubr.bf16.gmra.mrb[0].mxu0 %v467
    %v604 = vpop.f32.mrb[0].mxu0
    %v605 = vadd.f32 0.0, %v604
    %v606 = vpop.f32.mrb[0].mxu0
    %v607 = vadd.f32 0.0, %v606
    %v608 = vpop.f32.mrb[0].mxu0
    %v609 = vadd.f32 0.0, %v608
    %v610 = vpop.f32.mrb[0].mxu0
    %v611 = vadd.f32 0.0, %v610
    %612 = vmatprep.mubr.bf16.mxu0 0
    %613 = vmatmul.mubr.bf16.gmra.mrb[0].mxu0 %v470
    %v614 = vpop.f32.mrb[0].mxu0
    %v615 = vadd.f32 0.0, %v614
    %v616 = vpop.f32.mrb[0].mxu0
    %v617 = vadd.f32 0.0, %v616
    %v618 = vpop.f32.mrb[0].mxu0
    %v619 = vadd.f32 0.0, %v618
    %v620 = vpop.f32.mrb[0].mxu0
    %v621 = vadd.f32 0.0, %v620
    %622 = vmatprep.mubr.bf16.mxu0 0
    %623 = vmatmul.mubr.bf16.gmra.mrb[0].mxu0 %v473
    %v624 = vpop.f32.mrb[0].mxu0
    %v625 = vadd.f32 0.0, %v624
    %v626 = vpop.f32.mrb[0].mxu0
    %v627 = vadd.f32 0.0, %v626
    %v628 = vpop.f32.mrb[0].mxu0
    %v629 = vadd.f32 0.0, %v628
    %v630 = vpop.f32.mrb[0].mxu0
    %v631 = vadd.f32 0.0, %v630
    %632 = vmatprep.mubr.bf16.mxu0 0
    %633 = vmatmul.mubr.bf16.gmra.mrb[0].mxu0 %v476
    %v634 = vpop.f32.mrb[0].mxu0
    %v635 = vadd.f32 0.0, %v634
    %v636 = vpop.f32.mrb[0].mxu0
    %v637 = vadd.f32 0.0, %v636
    %v638 = vpop.f32.mrb[0].mxu0
    %v639 = vadd.f32 0.0, %v638
    %v640 = vpop.f32.mrb[0].mxu0
    %v641 = vadd.f32 0.0, %v640
    %642 = vmatprep.mubr.bf16.mxu0 0
    %643 = vmatmul.mubr.bf16.gmra.mrb[0].mxu0 %v479
    %v644 = vpop.f32.mrb[0].mxu0
    %v645 = vadd.f32 0.0, %v644
    %v646 = vpop.f32.mrb[0].mxu0
    %v647 = vadd.f32 0.0, %v646
    %v648 = vpop.f32.mrb[0].mxu0
    %v649 = vadd.f32 0.0, %v648
    %v650 = vpop.f32.mrb[0].mxu0
    %v651 = vadd.f32 0.0, %v650
    %652 = vmatprep.mubr.bf16.mxu0 0
    %653 = vmatmul.mubr.bf16.gmra.mrb[0].mxu0 %v482
    %v654 = vpop.f32.mrb[0].mxu0
    %v655 = vadd.f32 0.0, %v654
    %v656 = vpop.f32.mrb[0].mxu0
    %v657 = vadd.f32 0.0, %v656
    %v658 = vpop.f32.mrb[0].mxu0
    %v659 = vadd.f32 0.0, %v658
    %v660 = vpop.f32.mrb[0].mxu0
    %v661 = vadd.f32 0.0, %v660
    %662 = vmatprep.mubr.bf16.mxu0 0
    %663 = vmatmul.mubr.bf16.gmra.mrb[0].mxu0 %v485
    %v664 = vpop.f32.mrb[0].mxu0
    %v665 = vadd.f32 0.0, %v664
    %v666 = vpop.f32.mrb[0].mxu0
    %v667 = vadd.f32 0.0, %v666
    %v668 = vpop.f32.mrb[0].mxu0
    %v669 = vadd.f32 0.0, %v668
    %v670 = vpop.f32.mrb[0].mxu0
    %v671 = vadd.f32 0.0, %v670
    %672 = vmatprep.mubr.bf16.mxu0 0
    %673 = vmatmul.mubr.bf16.gmra.mrb[0].mxu0 %v488
    %v674 = vpop.f32.mrb[0].mxu0
    %v675 = vadd.f32 0.0, %v674
    %v676 = vpop.f32.mrb[0].mxu0
    %v677 = vadd.f32 0.0, %v676
    %v678 = vpop.f32.mrb[0].mxu0
    %v679 = vadd.f32 0.0, %v678
    %v680 = vpop.f32.mrb[0].mxu0
    %v681 = vadd.f32 0.0, %v680
    %682 = vdwg.mxu0
    %v683 = vpack.c.bf16 %v529, %v525
    %v684 = vpack.c.bf16 %v531, %v527
    %v685 = vpack.c.bf16 %v539, %v535
    %v686 = vpack.c.bf16 %v541, %v537
    %v687 = vpack.c.bf16 %v549, %v545
    %v688 = vpack.c.bf16 %v551, %v547
    %v689 = vpack.c.bf16 %v559, %v555
    %v690 = vpack.c.bf16 %v561, %v557
    %v691 = vpack.c.bf16 %v569, %v565
    %v692 = vpack.c.bf16 %v571, %v567
    %v693 = vpack.c.bf16 %v579, %v575
    %v694 = vpack.c.bf16 %v581, %v577
    %v695 = vpack.c.bf16 %v589, %v585
    %v696 = vpack.c.bf16 %v591, %v587
    %v697 = vpack.c.bf16 %v599, %v595
    %v698 = vpack.c.bf16 %v601, %v597
    %v699 = vpack.c.bf16 %v609, %v605
    %v700 = vpack.c.bf16 %v611, %v607
    %v701 = vpack.c.bf16 %v619, %v615
    %v702 = vpack.c.bf16 %v621, %v617
    %v703 = vpack.c.bf16 %v629, %v625
    %v704 = vpack.c.bf16 %v631, %v627
    %v705 = vpack.c.bf16 %v639, %v635
    %v706 = vpack.c.bf16 %v641, %v637
    %v707 = vpack.c.bf16 %v649, %v645
    %v708 = vpack.c.bf16 %v651, %v647
    %v709 = vpack.c.bf16 %v659, %v655
    %v710 = vpack.c.bf16 %v661, %v657
    %v711 = vpack.c.bf16 %v669, %v665
    %v712 = vpack.c.bf16 %v671, %v667
    %v713 = vpack.c.bf16 %v679, %v675
    %v714 = vpack.c.bf16 %v681, %v677
    %731 = vrot.lane.b32.xlu0 %v401, 32
    %v732 = vpop.permute.xlu0 %731
    %733 = vrot.lane.b32.xlu0 %v402, 32
    %v734 = vpop.permute.xlu0 %733
    %735 = vrot.lane.b32.xlu0 %v403, 32
    %v736 = vpop.permute.xlu0 %735
    %737 = vrot.lane.b32.xlu0 %v404, 32
    %v738 = vpop.permute.xlu0 %737
    %739 = vrot.lane.b32.xlu0 %v405, 32
    %v740 = vpop.permute.xlu0 %739
    %741 = vrot.lane.b32.xlu0 %v406, 32
    %v742 = vpop.permute.xlu0 %741
    %743 = vrot.lane.b32.xlu0 %v407, 32
    %v744 = vpop.permute.xlu0 %743
    %745 = vrot.lane.b32.xlu0 %v408, 32
    %v746 = vpop.permute.xlu0 %745
    %747 = vrot.lane.b32.xlu0 %v409, 32
    %v748 = vpop.permute.xlu0 %747
    %749 = vrot.lane.b32.xlu0 %v410, 32
    %v750 = vpop.permute.xlu0 %749
    %751 = vrot.lane.b32.xlu0 %v411, 32
    %v752 = vpop.permute.xlu0 %751
    %753 = vrot.lane.b32.xlu0 %v412, 32
    %v754 = vpop.permute.xlu0 %753
    %755 = vrot.lane.b32.xlu0 %v413, 32
    %v756 = vpop.permute.xlu0 %755
    %757 = vrot.lane.b32.xlu0 %v414, 32
    %v758 = vpop.permute.xlu0 %757
    %759 = vrot.lane.b32.xlu0 %v415, 32
    %v760 = vpop.permute.xlu0 %759
    %761 = vrot.lane.b32.xlu0 %v416, 32
    %v762 = vpop.permute.xlu0 %761
    %763 = vrot.lane.b32.xlu0 %v401, 64
    %v764 = vpop.permute.xlu0 %763
    %765 = vrot.lane.b32.xlu0 %v402, 64
    %v766 = vpop.permute.xlu0 %765
    %767 = vrot.lane.b32.xlu0 %v403, 64
    %v768 = vpop.permute.xlu0 %767
    %769 = vrot.lane.b32.xlu0 %v404, 64
    %v770 = vpop.permute.xlu0 %769
    %771 = vrot.lane.b32.xlu0 %v405, 64
    %v772 = vpop.permute.xlu0 %771
    %773 = vrot.lane.b32.xlu0 %v406, 64
    %v774 = vpop.permute.xlu0 %773
    %775 = vrot.lane.b32.xlu0 %v407, 64
    %v776 = vpop.permute.xlu0 %775
    %777 = vrot.lane.b32.xlu0 %v408, 64
    %v778 = vpop.permute.xlu0 %777
    %779 = vrot.lane.b32.xlu0 %v409, 64
    %v780 = vpop.permute.xlu0 %779
    %781 = vrot.lane.b32.xlu0 %v410, 64
    %v782 = vpop.permute.xlu0 %781
    %783 = vrot.lane.b32.xlu0 %v411, 64
    %v784 = vpop.permute.xlu0 %783
    %785 = vrot.lane.b32.xlu0 %v412, 64
    %v786 = vpop.permute.xlu0 %785
    %787 = vrot.lane.b32.xlu0 %v413, 64
    %v788 = vpop.permute.xlu0 %787
    %789 = vrot.lane.b32.xlu0 %v414, 64
    %v790 = vpop.permute.xlu0 %789
    %791 = vrot.lane.b32.xlu0 %v415, 64
    %v792 = vpop.permute.xlu0 %791
    %793 = vrot.lane.b32.xlu0 %v416, 64
    %v794 = vpop.permute.xlu0 %793
    %795 = vrot.lane.b32.xlu0 %v401, 96
    %v796 = vpop.permute.xlu0 %795
    %797 = vrot.lane.b32.xlu0 %v402, 96
    %v798 = vpop.permute.xlu0 %797
    %799 = vrot.lane.b32.xlu0 %v403, 96
    %v800 = vpop.permute.xlu0 %799
    %801 = vrot.lane.b32.xlu0 %v404, 96
    %v802 = vpop.permute.xlu0 %801
    %803 = vrot.lane.b32.xlu0 %v405, 96
    %v804 = vpop.permute.xlu0 %803
    %805 = vrot.lane.b32.xlu0 %v406, 96
    %v806 = vpop.permute.xlu0 %805
    %807 = vrot.lane.b32.xlu0 %v407, 96
    %v808 = vpop.permute.xlu0 %807
    %809 = vrot.lane.b32.xlu0 %v408, 96
    %v810 = vpop.permute.xlu0 %809
    %811 = vrot.lane.b32.xlu0 %v409, 96
    %v812 = vpop.permute.xlu0 %811
    %813 = vrot.lane.b32.xlu0 %v410, 96
    %v814 = vpop.permute.xlu0 %813
    %815 = vrot.lane.b32.xlu0 %v411, 96
    %v816 = vpop.permute.xlu0 %815
    %817 = vrot.lane.b32.xlu0 %v412, 96
    %v818 = vpop.permute.xlu0 %817
    %819 = vrot.lane.b32.xlu0 %v413, 96
    %v820 = vpop.permute.xlu0 %819
    %821 = vrot.lane.b32.xlu0 %v414, 96
    %v822 = vpop.permute.xlu0 %821
    %823 = vrot.lane.b32.xlu0 %v415, 96
    %v824 = vpop.permute.xlu0 %823
    %825 = vrot.lane.b32.xlu0 %v416, 96
    %v826 = vpop.permute.xlu0 %825
    %v829 = vsel %vm441, %v401, %v732
    %v832 = vsel %vm441, %v402, %v734
    %v835 = vsel %vm441, %v403, %v736
    %v838 = vsel %vm441, %v404, %v738
    %v841 = vsel %vm441, %v405, %v740
    %v844 = vsel %vm441, %v406, %v742
    %v847 = vsel %vm441, %v407, %v744
    %v850 = vsel %vm441, %v408, %v746
    %v853 = vsel %vm441, %v409, %v748
    %v856 = vsel %vm441, %v410, %v750
    %v859 = vsel %vm441, %v411, %v752
    %v862 = vsel %vm441, %v412, %v754
    %v865 = vsel %vm441, %v413, %v756
    %v868 = vsel %vm441, %v414, %v758
    %v871 = vsel %vm441, %v415, %v760
    %v874 = vsel %vm441, %v416, %v762
    %vm875 = vcmask 523264
    %v877 = vsel %vm875, %v829, %v764
    %v879 = vsel %vm875, %v832, %v766
    %v881 = vsel %vm875, %v835, %v768
    %v883 = vsel %vm875, %v838, %v770
    %v885 = vsel %vm875, %v841, %v772
    %v887 = vsel %vm875, %v844, %v774
    %v889 = vsel %vm875, %v847, %v776
    %v891 = vsel %vm875, %v850, %v778
    %v893 = vsel %vm875, %v853, %v780
    %v895 = vsel %vm875, %v856, %v782
    %v897 = vsel %vm875, %v859, %v784
    %v899 = vsel %vm875, %v862, %v786
    %v901 = vsel %vm875, %v865, %v788
    %v903 = vsel %vm875, %v868, %v790
    %v905 = vsel %vm875, %v871, %v792
    %v907 = vsel %vm875, %v874, %v794
    %vm908 = vcmask 785408
    %v910 = vsel %vm908, %v877, %v796
    %v913 = vsel %vm908, %v879, %v798
    %v916 = vsel %vm908, %v881, %v800
    %v919 = vsel %vm908, %v883, %v802
    %v922 = vsel %vm908, %v885, %v804
    %v925 = vsel %vm908, %v887, %v806
    %v928 = vsel %vm908, %v889, %v808
    %v931 = vsel %vm908, %v891, %v810
    %v934 = vsel %vm908, %v893, %v812
    %v937 = vsel %vm908, %v895, %v814
    %v940 = vsel %vm908, %v897, %v816
    %v943 = vsel %vm908, %v899, %v818
    %v946 = vsel %vm908, %v901, %v820
    %v949 = vsel %vm908, %v903, %v822
    %v952 = vsel %vm908, %v905, %v824
    %v955 = vsel %vm908, %v907, %v826
    %v957 = vmul.bf16 %v683, %v910
    %v958 = vmul.bf16 %v684, %v910
    %v959 = vmul.bf16 %v685, %v913
    %v960 = vmul.bf16 %v686, %v913
    %v961 = vmul.bf16 %v687, %v916
    %v962 = vmul.bf16 %v688, %v916
    %v963 = vmul.bf16 %v689, %v919
    %v964 = vmul.bf16 %v690, %v919
    %v965 = vmul.bf16 %v691, %v922
    %v966 = vmul.bf16 %v692, %v922
    %v967 = vmul.bf16 %v693, %v925
    %v968 = vmul.bf16 %v694, %v925
    %v969 = vmul.bf16 %v695, %v928
    %v970 = vmul.bf16 %v696, %v928
    %v971 = vmul.bf16 %v697, %v931
    %v972 = vmul.bf16 %v698, %v931
    %v973 = vmul.bf16 %v699, %v934
    %v974 = vmul.bf16 %v700, %v934
    %v975 = vmul.bf16 %v701, %v937
    %v976 = vmul.bf16 %v702, %v937
    %v977 = vmul.bf16 %v703, %v940
    %v978 = vmul.bf16 %v704, %v940
    %v979 = vmul.bf16 %v705, %v943
    %v980 = vmul.bf16 %v706, %v943
    %v981 = vmul.bf16 %v707, %v946
    %v982 = vmul.bf16 %v708, %v946
    %v983 = vmul.bf16 %v709, %v949
    %v984 = vmul.bf16 %v710, %v949
    %v985 = vmul.bf16 %v711, %v952
    %v986 = vmul.bf16 %v712, %v952
    %v987 = vmul.bf16 %v713, %v955
    %v988 = vmul.bf16 %v714, %v955
    %v989 = vsel %vm441, %v353, %v732
    %v990 = vsel %vm441, %v354, %v734
    %v991 = vsel %vm441, %v355, %v736
    %v992 = vsel %vm441, %v356, %v738
    %v993 = vsel %vm441, %v357, %v740
    %v994 = vsel %vm441, %v358, %v742
    %v995 = vsel %vm441, %v359, %v744
    %v996 = vsel %vm441, %v360, %v746
    %v997 = vsel %vm441, %v361, %v748
    %v998 = vsel %vm441, %v362, %v750
    %v999 = vsel %vm441, %v363, %v752
    %v1000 = vsel %vm441, %v364, %v754
    %v1001 = vsel %vm441, %v365, %v756
    %v1002 = vsel %vm441, %v366, %v758
    %v1003 = vsel %vm441, %v367, %v760
    %v1004 = vsel %vm441, %v368, %v762
    %v1005 = vld [vmem:[#allocation2] sm:$0xf]
    %v1006 = vld [vmem:[#allocation2 + $0x4] sm:$0xf]
    %v1007 = vld [vmem:[#allocation2 + $0x8] sm:$0xf]
    %v1008 = vld [vmem:[#allocation2 + $0xc] sm:$0xf]
    %v1009 = vld [vmem:[#allocation2 + $0x10] sm:$0xf]
    %v1010 = vld [vmem:[#allocation2 + $0x14] sm:$0xf]
    %v1011 = vld [vmem:[#allocation2 + $0x18] sm:$0xf]
    %v1012 = vld [vmem:[#allocation2 + $0x1c] sm:$0xf]
    %v1013 = vld [vmem:[#allocation2 + $0x20] sm:$0xf]
    %v1014 = vld [vmem:[#allocation2 + $0x24] sm:$0xf]
    %v1015 = vld [vmem:[#allocation2 + $0x28] sm:$0xf]
    %v1016 = vld [vmem:[#allocation2 + $0x2c] sm:$0xf]
    %v1017 = vld [vmem:[#allocation2 + $0x30] sm:$0xf]
    %v1018 = vld [vmem:[#allocation2 + $0x34] sm:$0xf]
    %v1019 = vld [vmem:[#allocation2 + $0x38] sm:$0xf]
    %v1020 = vld [vmem:[#allocation2 + $0x3c] sm:$0xf]
    %v1021 = vld [vmem:[#allocation2 + $0x40] sm:$0xf]
    %v1022 = vld [vmem:[#allocation2 + $0x44] sm:$0xf]
    %v1023 = vld [vmem:[#allocation2 + $0x48] sm:$0xf]
    %v1024 = vld [vmem:[#allocation2 + $0x4c] sm:$0xf]
    %v1025 = vld [vmem:[#allocation2 + $0x50] sm:$0xf]
    %v1026 = vld [vmem:[#allocation2 + $0x54] sm:$0xf]
    %v1027 = vld [vmem:[#allocation2 + $0x58] sm:$0xf]
    %v1028 = vld [vmem:[#allocation2 + $0x5c] sm:$0xf]
    %v1029 = vld [vmem:[#allocation2 + $0x60] sm:$0xf]
    %v1030 = vld [vmem:[#allocation2 + $0x64] sm:$0xf]
    %v1031 = vld [vmem:[#allocation2 + $0x68] sm:$0xf]
    %v1032 = vld [vmem:[#allocation2 + $0x6c] sm:$0xf]
    %v1033 = vld [vmem:[#allocation2 + $0x70] sm:$0xf]
    %v1034 = vld [vmem:[#allocation2 + $0x74] sm:$0xf]
    %v1035 = vld [vmem:[#allocation2 + $0x78] sm:$0xf]
    %v1036 = vld [vmem:[#allocation2 + $0x7c] sm:$0xf]
    %v1037 = vld [vmem:[#allocation2 + $0x80] sm:$0xf]
    %v1038 = vld [vmem:[#allocation2 + $0x84] sm:$0xf]
    %v1039 = vld [vmem:[#allocation2 + $0x88] sm:$0xf]
    %v1040 = vld [vmem:[#allocation2 + $0x8c] sm:$0xf]
    %v1041 = vld [vmem:[#allocation2 + $0x90] sm:$0xf]
    %v1042 = vld [vmem:[#allocation2 + $0x94] sm:$0xf]
    %v1043 = vld [vmem:[#allocation2 + $0x98] sm:$0xf]
    %v1044 = vld [vmem:[#allocation2 + $0x9c] sm:$0xf]
    %v1045 = vld [vmem:[%s6] sm:$0x1]
    %v1047 = vlaneseq
    %v1048 = vshrl.u32 %v1047, 7
    %v1049 = vsub.s32 0, %v1048
    %v1050 = vrot.slane %v1045, %v1049
    %v1092 = vunpack.c.l.b16 %v1005
    %v1093 = vunpack.c.l.b16 %v1006
    %v1094 = vunpack.c.l.b16 %v1007
    %v1095 = vunpack.c.l.b16 %v1008
    %v1096 = vunpack.c.l.b16 %v1009
    %v1097 = vunpack.c.l.b16 %v1010
    %v1098 = vunpack.c.l.b16 %v1011
    %v1099 = vunpack.c.l.b16 %v1012
    %v1100 = vunpack.c.l.b16 %v1013
    %v1101 = vunpack.c.l.b16 %v1014
    %v1102 = vunpack.c.l.b16 %v1015
    %v1103 = vunpack.c.l.b16 %v1016
    %v1104 = vunpack.c.l.b16 %v1017
    %v1105 = vunpack.c.l.b16 %v1018
    %v1106 = vunpack.c.l.b16 %v1019
    %v1107 = vunpack.c.l.b16 %v1020
    %v1108 = vunpack.c.l.b16 %v1021
    %v1109 = vunpack.c.l.b16 %v1022
    %v1110 = vunpack.c.l.b16 %v1023
    %v1111 = vunpack.c.l.b16 %v1024
    %v1112 = vunpack.c.l.b16 %v1025
    %v1113 = vunpack.c.l.b16 %v1026
    %v1114 = vunpack.c.l.b16 %v1027
    %v1115 = vunpack.c.l.b16 %v1028
    %v1116 = vunpack.c.l.b16 %v1029
    %v1117 = vunpack.c.l.b16 %v1030
    %v1118 = vunpack.c.l.b16 %v1031
    %v1119 = vunpack.c.l.b16 %v1032
    %v1120 = vunpack.c.l.b16 %v1033
    %v1121 = vunpack.c.l.b16 %v1034
    %v1122 = vunpack.c.l.b16 %v1035
    %v1123 = vunpack.c.l.b16 %v1036
    %v1124 = vunpack.c.l.b16 %v1037
    %v1125 = vunpack.c.l.b16 %v1038
    %v1126 = vunpack.c.l.b16 %v1039
    %v1127 = vunpack.c.l.b16 %v1040
    %v1128 = vunpack.c.l.b16 %v1041
    %v1129 = vunpack.c.l.b16 %v1042
    %v1130 = vunpack.c.l.b16 %v1043
    %v1131 = vunpack.c.l.b16 %v1044
    %v1132 = vpack.c.b16 %v1093, %v1092
    %v1133 = vpack.c.b16 %v1095, %v1094
    %v1134 = vpack.c.b16 %v1097, %v1096
    %v1135 = vpack.c.b16 %v1099, %v1098
    %v1136 = vpack.c.b16 %v1101, %v1100
    %v1137 = vpack.c.b16 %v1103, %v1102
    %v1138 = vpack.c.b16 %v1105, %v1104
    %v1139 = vpack.c.b16 %v1107, %v1106
    %v1140 = vpack.c.b16 %v1109, %v1108
    %v1141 = vpack.c.b16 %v1111, %v1110
    %v1142 = vpack.c.b16 %v1113, %v1112
    %v1143 = vpack.c.b16 %v1115, %v1114
    %v1144 = vpack.c.b16 %v1117, %v1116
    %v1145 = vpack.c.b16 %v1119, %v1118
    %v1146 = vpack.c.b16 %v1121, %v1120
    %v1147 = vpack.c.b16 %v1123, %v1122
    %v1148 = vpack.c.b16 %v1125, %v1124
    %v1149 = vpack.c.b16 %v1127, %v1126
    %v1150 = vpack.c.b16 %v1129, %v1128
    %v1151 = vpack.c.b16 %v1131, %v1130
    %v1172 = vsel %vm875, %v989, 0
    %v1174 = vsel %vm875, %v990, 0
    %v1176 = vsel %vm875, %v991, 0
    %v1178 = vsel %vm875, %v992, 0
    %v1180 = vsel %vm875, %v993, 0
    %v1182 = vsel %vm875, %v994, 0
    %v1184 = vsel %vm875, %v995, 0
    %v1186 = vsel %vm875, %v996, 0
    %v1188 = vsel %vm875, %v997, 0
    %v1190 = vsel %vm875, %v998, 0
    %v1192 = vsel %vm875, %v999, 0
    %v1194 = vsel %vm875, %v1000, 0
    %v1196 = vsel %vm875, %v1001, 0
    %v1198 = vsel %vm875, %v1002, 0
    %v1200 = vsel %vm875, %v1003, 0
    %v1202 = vsel %vm875, %v1004, 0
    %1204 = vmatprep.subr.bf16.mxu0 0
    %1205 = vmatpush1.bf16.msra.mxu0 %v1132
    %1206 = vmatprep.subr.bf16.mxu0 0
    %1207 = vmatpush1.bf16.msra.mxu0 %v1133
    %1208 = vmatprep.subr.bf16.mxu0 0
    %1209 = vmatpush1.bf16.msra.mxu0 %v1134
    %1210 = vmatprep.subr.bf16.mxu0 0
    %1211 = vmatpush1.bf16.msra.mxu0 %v1135
    %1212 = vmatprep.subr.bf16.mxu0 0
    %1213 = vmatpush1.bf16.msra.mxu0 %v1136
    %1214 = vmatprep.subr.bf16.mxu0 0
    %1215 = vmatpush1.bf16.msra.mxu0 %v1137
    %1216 = vmatprep.subr.bf16.mxu0 0
    %1217 = vmatpush1.bf16.msra.mxu0 %v1138
    %1218 = vmatprep.subr.bf16.mxu0 0
    %1219 = vmatpush1.bf16.msra.mxu0 %v1139
    %1220 = vmatprep.subr.bf16.mxu0 0
    %1221 = vmatpush1.bf16.msra.mxu0 %v1140
    %1222 = vmatprep.subr.bf16.mxu0 0
    %1223 = vmatpush1.bf16.msra.mxu0 %v1141
    %1224 = vmatprep.subr.bf16.mxu0 0
    %1225 = vmatpush1.bf16.msra.mxu0 %v1142
    %1226 = vmatprep.subr.bf16.mxu0 0
    %1227 = vmatpush1.bf16.msra.mxu0 %v1143
    %1228 = vmatprep.subr.bf16.mxu0 0
    %1229 = vmatpush1.bf16.msra.mxu0 %v1144
    %1230 = vmatprep.subr.bf16.mxu0 0
    %1231 = vmatpush1.bf16.msra.mxu0 %v1145
    %1232 = vmatprep.subr.bf16.mxu0 0
    %1233 = vmatpush1.bf16.msra.mxu0 %v1146
    %1234 = vmatprep.subr.bf16.mxu0 0
    %1235 = vmatpush1.bf16.msra.mxu0 %v1147
    %1236 = vmatprep.mubr.bf16.mxu0 %v958
    %1237 = vmatmul.mubr.bf16.gmra.mrb[0].mxu0 %v957
    %v1238 = vpop.f32.mrb[0].mxu0
    %v1239 = vadd.f32 %v1050, %v1238
    %v1240 = vpop.f32.mrb[0].mxu0
    %v1241 = vpop.f32.mrb[0].mxu0
    %v1242 = vadd.f32 %v1050, %v1241
    %v1243 = vpop.f32.mrb[0].mxu0
    %1244 = vmatprep.mubr.bf16.mxu0 %v960
    %1245 = vmatmul.mubr.bf16.gmra.mrb[0].mxu0 %v959
    %v1246 = vpop.f32.mrb[0].mxu0
    %v1247 = vadd.f32 %v1050, %v1246
    %v1248 = vpop.f32.mrb[0].mxu0
    %v1249 = vpop.f32.mrb[0].mxu0
    %v1250 = vadd.f32 %v1050, %v1249
    %v1251 = vpop.f32.mrb[0].mxu0
    %1252 = vmatprep.mubr.bf16.mxu0 %v962
    %1253 = vmatmul.mubr.bf16.gmra.mrb[0].mxu0 %v961
    %v1254 = vpop.f32.mrb[0].mxu0
    %v1255 = vadd.f32 %v1050, %v1254
    %v1256 = vpop.f32.mrb[0].mxu0
    %v1257 = vpop.f32.mrb[0].mxu0
    %v1258 = vadd.f32 %v1050, %v1257
    %v1259 = vpop.f32.mrb[0].mxu0
    %1260 = vmatprep.mubr.bf16.mxu0 %v964
    %1261 = vmatmul.mubr.bf16.gmra.mrb[0].mxu0 %v963
    %v1262 = vpop.f32.mrb[0].mxu0
    %v1263 = vadd.f32 %v1050, %v1262
    %v1264 = vpop.f32.mrb[0].mxu0
    %v1265 = vpop.f32.mrb[0].mxu0
    %v1266 = vadd.f32 %v1050, %v1265
    %v1267 = vpop.f32.mrb[0].mxu0
    %1268 = vmatprep.mubr.bf16.mxu0 %v966
    %1269 = vmatmul.mubr.bf16.gmra.mrb[0].mxu0 %v965
    %v1270 = vpop.f32.mrb[0].mxu0
    %v1271 = vadd.f32 %v1050, %v1270
    %v1272 = vpop.f32.mrb[0].mxu0
    %v1273 = vpop.f32.mrb[0].mxu0
    %v1274 = vadd.f32 %v1050, %v1273
    %v1275 = vpop.f32.mrb[0].mxu0
    %1276 = vmatprep.mubr.bf16.mxu0 %v968
    %1277 = vmatmul.mubr.bf16.gmra.mrb[0].mxu0 %v967
    %v1278 = vpop.f32.mrb[0].mxu0
    %v1279 = vadd.f32 %v1050, %v1278
    %v1280 = vpop.f32.mrb[0].mxu0
    %v1281 = vpop.f32.mrb[0].mxu0
    %v1282 = vadd.f32 %v1050, %v1281
    %v1283 = vpop.f32.mrb[0].mxu0
    %1284 = vmatprep.mubr.bf16.mxu0 %v970
    %1285 = vmatmul.mubr.bf16.gmra.mrb[0].mxu0 %v969
    %v1286 = vpop.f32.mrb[0].mxu0
    %v1287 = vadd.f32 %v1050, %v1286
    %v1288 = vpop.f32.mrb[0].mxu0
    %v1289 = vpop.f32.mrb[0].mxu0
    %v1290 = vadd.f32 %v1050, %v1289
    %v1291 = vpop.f32.mrb[0].mxu0
    %1292 = vmatprep.mubr.bf16.mxu0 %v972
    %1293 = vmatmul.mubr.bf16.gmra.mrb[0].mxu0 %v971
    %v1294 = vpop.f32.mrb[0].mxu0
    %v1295 = vadd.f32 %v1050, %v1294
    %v1296 = vpop.f32.mrb[0].mxu0
    %v1297 = vpop.f32.mrb[0].mxu0
    %v1298 = vadd.f32 %v1050, %v1297
    %v1299 = vpop.f32.mrb[0].mxu0
    %1300 = vmatprep.mubr.bf16.mxu0 %v974
    %1301 = vmatmul.mubr.bf16.gmra.mrb[0].mxu0 %v973
    %v1302 = vpop.f32.mrb[0].mxu0
    %v1303 = vadd.f32 %v1050, %v1302
    %v1304 = vpop.f32.mrb[0].mxu0
    %v1305 = vpop.f32.mrb[0].mxu0
    %v1306 = vadd.f32 %v1050, %v1305
    %v1307 = vpop.f32.mrb[0].mxu0
    %1308 = vmatprep.mubr.bf16.mxu0 %v976
    %1309 = vmatmul.mubr.bf16.gmra.mrb[0].mxu0 %v975
    %v1310 = vpop.f32.mrb[0].mxu0
    %v1311 = vadd.f32 %v1050, %v1310
    %v1312 = vpop.f32.mrb[0].mxu0
    %v1313 = vpop.f32.mrb[0].mxu0
    %v1314 = vadd.f32 %v1050, %v1313
    %v1315 = vpop.f32.mrb[0].mxu0
    %1316 = vmatprep.mubr.bf16.mxu0 %v978
    %1317 = vmatmul.mubr.bf16.gmra.mrb[0].mxu0 %v977
    %v1318 = vpop.f32.mrb[0].mxu0
    %v1319 = vadd.f32 %v1050, %v1318
    %v1320 = vpop.f32.mrb[0].mxu0
    %v1321 = vpop.f32.mrb[0].mxu0
    %v1322 = vadd.f32 %v1050, %v1321
    %v1323 = vpop.f32.mrb[0].mxu0
    %1324 = vmatprep.mubr.bf16.mxu0 %v980
    %1325 = vmatmul.mubr.bf16.gmra.mrb[0].mxu0 %v979
    %v1326 = vpop.f32.mrb[0].mxu0
    %v1327 = vadd.f32 %v1050, %v1326
    %v1328 = vpop.f32.mrb[0].mxu0
    %v1329 = vpop.f32.mrb[0].mxu0
    %v1330 = vadd.f32 %v1050, %v1329
    %v1331 = vpop.f32.mrb[0].mxu0
    %1332 = vmatprep.mubr.bf16.mxu0 %v982
    %1333 = vmatmul.mubr.bf16.gmra.mrb[0].mxu0 %v981
    %v1334 = vpop.f32.mrb[0].mxu0
    %v1335 = vadd.f32 %v1050, %v1334
    %v1336 = vpop.f32.mrb[0].mxu0
    %v1337 = vpop.f32.mrb[0].mxu0
    %v1338 = vadd.f32 %v1050, %v1337
    %v1339 = vpop.f32.mrb[0].mxu0
    %1340 = vmatprep.mubr.bf16.mxu0 %v984
    %1341 = vmatmul.mubr.bf16.gmra.mrb[0].mxu0 %v983
    %v1342 = vpop.f32.mrb[0].mxu0
    %v1343 = vadd.f32 %v1050, %v1342
    %v1344 = vpop.f32.mrb[0].mxu0
    %v1345 = vpop.f32.mrb[0].mxu0
    %v1346 = vadd.f32 %v1050, %v1345
    %v1347 = vpop.f32.mrb[0].mxu0
    %1348 = vmatprep.mubr.bf16.mxu0 %v986
    %1349 = vmatmul.mubr.bf16.gmra.mrb[0].mxu0 %v985
    %v1350 = vpop.f32.mrb[0].mxu0
    %v1351 = vadd.f32 %v1050, %v1350
    %v1352 = vpop.f32.mrb[0].mxu0
    %v1353 = vpop.f32.mrb[0].mxu0
    %v1354 = vadd.f32 %v1050, %v1353
    %v1355 = vpop.f32.mrb[0].mxu0
    %1356 = vmatprep.mubr.bf16.mxu0 %v988
    %1357 = vmatmul.mubr.bf16.gmra.mrb[0].mxu0 %v987
    %v1358 = vpop.f32.mrb[0].mxu0
    %v1359 = vadd.f32 %v1050, %v1358
    %v1360 = vpop.f32.mrb[0].mxu0
    %v1361 = vpop.f32.mrb[0].mxu0
    %v1362 = vadd.f32 %v1050, %v1361
    %v1363 = vpop.f32.mrb[0].mxu0
    %1364 = vdwg.mxu0
    %1365 = vmatprep.subr.bf16.mxu0 0
    %1366 = vmatpush1.bf16.msra.mxu0 %v1148
    %1367 = vmatprep.subr.bf16.mxu0 0
    %1368 = vmatpush1.bf16.msra.mxu0 %v1149
    %1369 = vmatprep.subr.bf16.mxu0 0
    %1370 = vmatpush1.bf16.msra.mxu0 %v1150
    %1371 = vmatprep.subr.bf16.mxu0 0
    %1372 = vmatpush1.bf16.msra.mxu0 %v1151
    %1373 = vmatprep.subr.bf16.mxu0 0
    %1374 = vmatpush1.bf16.msra.mxu0 0
    %1375 = vmatprep.subr.bf16.mxu0 0
    %1376 = vmatpush1.bf16.msra.mxu0 0
    %1377 = vmatprep.subr.bf16.mxu0 0
    %1378 = vmatpush1.bf16.msra.mxu0 0
    %1379 = vmatprep.subr.bf16.mxu0 0
    %1380 = vmatpush1.bf16.msra.mxu0 0
    %1381 = vmatprep.subr.bf16.mxu0 0
    %1382 = vmatpush1.bf16.msra.mxu0 0
    %1383 = vmatprep.subr.bf16.mxu0 0
    %1384 = vmatpush1.bf16.msra.mxu0 0
    %1385 = vmatprep.subr.bf16.mxu0 0
    %1386 = vmatpush1.bf16.msra.mxu0 0
    %1387 = vmatprep.subr.bf16.mxu0 0
    %1388 = vmatpush1.bf16.msra.mxu0 0
    %1389 = vmatprep.subr.bf16.mxu0 0
    %1390 = vmatpush1.bf16.msra.mxu0 0
    %1391 = vmatprep.subr.bf16.mxu0 0
    %1392 = vmatpush1.bf16.msra.mxu0 0
    %1393 = vmatprep.subr.bf16.mxu0 0
    %1394 = vmatpush1.bf16.msra.mxu0 0
    %1395 = vmatprep.subr.bf16.mxu0 0
    %1396 = vmatpush1.bf16.msra.mxu0 0
    %1397 = vmatprep.mubr.bf16.mxu0 0
    %1398 = vmatmul.mubr.bf16.gmra.mrb[0].mxu0 %v1172
    %v1399 = vpop.f32.mrb[0].mxu0
    %v1400 = vadd.f32 %v1239, %v1399
    %v1401 = vpop.f32.mrb[0].mxu0
    %v1402 = vpop.f32.mrb[0].mxu0
    %v1403 = vadd.f32 %v1242, %v1402
    %v1404 = vpop.f32.mrb[0].mxu0
    %1405 = vmatprep.mubr.bf16.mxu0 0
    %1406 = vmatmul.mubr.bf16.gmra.mrb[0].mxu0 %v1174
    %v1407 = vpop.f32.mrb[0].mxu0
    %v1408 = vadd.f32 %v1247, %v1407
    %v1409 = vpop.f32.mrb[0].mxu0
    %v1410 = vpop.f32.mrb[0].mxu0
    %v1411 = vadd.f32 %v1250, %v1410
    %v1412 = vpop.f32.mrb[0].mxu0
    %1413 = vmatprep.mubr.bf16.mxu0 0
    %1414 = vmatmul.mubr.bf16.gmra.mrb[0].mxu0 %v1176
    %v1415 = vpop.f32.mrb[0].mxu0
    %v1416 = vadd.f32 %v1255, %v1415
    %v1417 = vpop.f32.mrb[0].mxu0
    %v1418 = vpop.f32.mrb[0].mxu0
    %v1419 = vadd.f32 %v1258, %v1418
    %v1420 = vpop.f32.mrb[0].mxu0
    %1421 = vmatprep.mubr.bf16.mxu0 0
    %1422 = vmatmul.mubr.bf16.gmra.mrb[0].mxu0 %v1178
    %v1423 = vpop.f32.mrb[0].mxu0
    %v1424 = vadd.f32 %v1263, %v1423
    %v1425 = vpop.f32.mrb[0].mxu0
    %v1426 = vpop.f32.mrb[0].mxu0
    %v1427 = vadd.f32 %v1266, %v1426
    %v1428 = vpop.f32.mrb[0].mxu0
    %1429 = vmatprep.mubr.bf16.mxu0 0
    %1430 = vmatmul.mubr.bf16.gmra.mrb[0].mxu0 %v1180
    %v1431 = vpop.f32.mrb[0].mxu0
    %v1432 = vadd.f32 %v1271, %v1431
    %v1433 = vpop.f32.mrb[0].mxu0
    %v1434 = vpop.f32.mrb[0].mxu0
    %v1435 = vadd.f32 %v1274, %v1434
    %v1436 = vpop.f32.mrb[0].mxu0
    %1437 = vmatprep.mubr.bf16.mxu0 0
    %1438 = vmatmul.mubr.bf16.gmra.mrb[0].mxu0 %v1182
    %v1439 = vpop.f32.mrb[0].mxu0
    %v1440 = vadd.f32 %v1279, %v1439
    %v1441 = vpop.f32.mrb[0].mxu0
    %v1442 = vpop.f32.mrb[0].mxu0
    %v1443 = vadd.f32 %v1282, %v1442
    %v1444 = vpop.f32.mrb[0].mxu0
    %1445 = vmatprep.mubr.bf16.mxu0 0
    %1446 = vmatmul.mubr.bf16.gmra.mrb[0].mxu0 %v1184
    %v1447 = vpop.f32.mrb[0].mxu0
    %v1448 = vadd.f32 %v1287, %v1447
    %v1449 = vpop.f32.mrb[0].mxu0
    %v1450 = vpop.f32.mrb[0].mxu0
    %v1451 = vadd.f32 %v1290, %v1450
    %v1452 = vpop.f32.mrb[0].mxu0
    %1453 = vmatprep.mubr.bf16.mxu0 0
    %1454 = vmatmul.mubr.bf16.gmra.mrb[0].mxu0 %v1186
    %v1455 = vpop.f32.mrb[0].mxu0
    %v1456 = vadd.f32 %v1295, %v1455
    %v1457 = vpop.f32.mrb[0].mxu0
    %v1458 = vpop.f32.mrb[0].mxu0
    %v1459 = vadd.f32 %v1298, %v1458
    %v1460 = vpop.f32.mrb[0].mxu0
    %1461 = vmatprep.mubr.bf16.mxu0 0
    %1462 = vmatmul.mubr.bf16.gmra.mrb[0].mxu0 %v1188
    %v1463 = vpop.f32.mrb[0].mxu0
    %v1464 = vadd.f32 %v1303, %v1463
    %v1465 = vpop.f32.mrb[0].mxu0
    %v1466 = vpop.f32.mrb[0].mxu0
    %v1467 = vadd.f32 %v1306, %v1466
    %v1468 = vpop.f32.mrb[0].mxu0
    %1469 = vmatprep.mubr.bf16.mxu0 0
    %1470 = vmatmul.mubr.bf16.gmra.mrb[0].mxu0 %v1190
    %v1471 = vpop.f32.mrb[0].mxu0
    %v1472 = vadd.f32 %v1311, %v1471
    %v1473 = vpop.f32.mrb[0].mxu0
    %v1474 = vpop.f32.mrb[0].mxu0
    %v1475 = vadd.f32 %v1314, %v1474
    %v1476 = vpop.f32.mrb[0].mxu0
    %1477 = vmatprep.mubr.bf16.mxu0 0
    %1478 = vmatmul.mubr.bf16.gmra.mrb[0].mxu0 %v1192
    %v1479 = vpop.f32.mrb[0].mxu0
    %v1480 = vadd.f32 %v1319, %v1479
    %v1481 = vpop.f32.mrb[0].mxu0
    %v1482 = vpop.f32.mrb[0].mxu0
    %v1483 = vadd.f32 %v1322, %v1482
    %v1484 = vpop.f32.mrb[0].mxu0
    %1485 = vmatprep.mubr.bf16.mxu0 0
    %1486 = vmatmul.mubr.bf16.gmra.mrb[0].mxu0 %v1194
    %v1487 = vpop.f32.mrb[0].mxu0
    %v1488 = vadd.f32 %v1327, %v1487
    %v1489 = vpop.f32.mrb[0].mxu0
    %v1490 = vpop.f32.mrb[0].mxu0
    %v1491 = vadd.f32 %v1330, %v1490
    %v1492 = vpop.f32.mrb[0].mxu0
    %1493 = vmatprep.mubr.bf16.mxu0 0
    %1494 = vmatmul.mubr.bf16.gmra.mrb[0].mxu0 %v1196
    %v1495 = vpop.f32.mrb[0].mxu0
    %v1496 = vadd.f32 %v1335, %v1495
    %v1497 = vpop.f32.mrb[0].mxu0
    %v1498 = vpop.f32.mrb[0].mxu0
    %v1499 = vadd.f32 %v1338, %v1498
    %v1500 = vpop.f32.mrb[0].mxu0
    %1501 = vmatprep.mubr.bf16.mxu0 0
    %1502 = vmatmul.mubr.bf16.gmra.mrb[0].mxu0 %v1198
    %v1503 = vpop.f32.mrb[0].mxu0
    %v1504 = vadd.f32 %v1343, %v1503
    %v1505 = vpop.f32.mrb[0].mxu0
    %v1506 = vpop.f32.mrb[0].mxu0
    %v1507 = vadd.f32 %v1346, %v1506
    %v1508 = vpop.f32.mrb[0].mxu0
    %1509 = vmatprep.mubr.bf16.mxu0 0
    %1510 = vmatmul.mubr.bf16.gmra.mrb[0].mxu0 %v1200
    %v1511 = vpop.f32.mrb[0].mxu0
    %v1512 = vadd.f32 %v1351, %v1511
    %v1513 = vpop.f32.mrb[0].mxu0
    %v1514 = vpop.f32.mrb[0].mxu0
    %v1515 = vadd.f32 %v1354, %v1514
    %v1516 = vpop.f32.mrb[0].mxu0
    %1517 = vmatprep.mubr.bf16.mxu0 0
    %1518 = vmatmul.mubr.bf16.gmra.mrb[0].mxu0 %v1202
    %v1519 = vpop.f32.mrb[0].mxu0
    %v1520 = vadd.f32 %v1359, %v1519
    %v1521 = vpop.f32.mrb[0].mxu0
    %v1522 = vpop.f32.mrb[0].mxu0
    %v1523 = vadd.f32 %v1362, %v1522
    %v1524 = vpop.f32.mrb[0].mxu0
    %1525 = vdwg.mxu0
    %v1526 = vpack.c.bf16 %v1403, %v1400
    %v1527 = vpack.c.bf16 %v1411, %v1408
    %v1528 = vpack.c.bf16 %v1419, %v1416
    %v1529 = vpack.c.bf16 %v1427, %v1424
    %v1530 = vpack.c.bf16 %v1435, %v1432
    %v1531 = vpack.c.bf16 %v1443, %v1440
    %v1532 = vpack.c.bf16 %v1451, %v1448
    %v1533 = vpack.c.bf16 %v1459, %v1456
    %v1534 = vpack.c.bf16 %v1467, %v1464
    %v1535 = vpack.c.bf16 %v1475, %v1472
    %v1536 = vpack.c.bf16 %v1483, %v1480
    %v1537 = vpack.c.bf16 %v1491, %v1488
    %v1538 = vpack.c.bf16 %v1499, %v1496
    %v1539 = vpack.c.bf16 %v1507, %v1504
    %v1540 = vpack.c.bf16 %v1515, %v1512
    %v1541 = vpack.c.bf16 %v1523, %v1520
    %v1558 = vunpack.c.l.b16 %v1526
    %v1559 = vunpack.c.h.b16 %v1526
    %v1560 = vunpack.c.l.b16 %v1527
    %v1561 = vunpack.c.h.b16 %v1527
    %v1562 = vunpack.c.l.b16 %v1528
    %v1563 = vunpack.c.h.b16 %v1528
    %v1564 = vunpack.c.l.b16 %v1529
    %v1565 = vunpack.c.h.b16 %v1529
    %v1566 = vunpack.c.l.b16 %v1530
    %v1567 = vunpack.c.h.b16 %v1530
    %v1568 = vunpack.c.l.b16 %v1531
    %v1569 = vunpack.c.h.b16 %v1531
    %v1570 = vunpack.c.l.b16 %v1532
    %v1571 = vunpack.c.h.b16 %v1532
    %v1572 = vunpack.c.l.b16 %v1533
    %v1573 = vunpack.c.h.b16 %v1533
    %v1574 = vunpack.c.l.b16 %v1534
    %v1575 = vunpack.c.h.b16 %v1534
    %v1576 = vunpack.c.l.b16 %v1535
    %v1577 = vunpack.c.h.b16 %v1535
    %v1578 = vunpack.c.l.b16 %v1536
    %v1579 = vunpack.c.h.b16 %v1536
    %v1580 = vunpack.c.l.b16 %v1537
    %v1581 = vunpack.c.h.b16 %v1537
    %v1582 = vunpack.c.l.b16 %v1538
    %v1583 = vunpack.c.h.b16 %v1538
    %v1584 = vunpack.c.l.b16 %v1539
    %v1585 = vunpack.c.h.b16 %v1539
    %v1586 = vunpack.c.l.b16 %v1540
    %v1587 = vunpack.c.h.b16 %v1540
    %v1588 = vunpack.c.l.b16 %v1541
    %v1589 = vunpack.c.h.b16 %v1541
    %v1590 = vpack.c.b16 %v1558, %v1558
    %v1591 = vpack.c.b16 %v1559, %v1559
    %v1592 = vpack.c.b16 %v1560, %v1560
    %v1593 = vpack.c.b16 %v1561, %v1561
    %v1594 = vpack.c.b16 %v1562, %v1562
    %v1595 = vpack.c.b16 %v1563, %v1563
    %v1596 = vpack.c.b16 %v1564, %v1564
    %v1597 = vpack.c.b16 %v1565, %v1565
    %v1598 = vpack.c.b16 %v1566, %v1566
    %v1599 = vpack.c.b16 %v1567, %v1567
    %v1600 = vpack.c.b16 %v1568, %v1568
    %v1601 = vpack.c.b16 %v1569, %v1569
    %v1602 = vpack.c.b16 %v1570, %v1570
    %v1603 = vpack.c.b16 %v1571, %v1571
    %v1604 = vpack.c.b16 %v1572, %v1572
    %v1605 = vpack.c.b16 %v1573, %v1573
    %v1606 = vpack.c.b16 %v1574, %v1574
    %v1607 = vpack.c.b16 %v1575, %v1575
    %v1608 = vpack.c.b16 %v1576, %v1576
    %v1609 = vpack.c.b16 %v1577, %v1577
    %v1610 = vpack.c.b16 %v1578, %v1578
    %v1611 = vpack.c.b16 %v1579, %v1579
    %v1612 = vpack.c.b16 %v1580, %v1580
    %v1613 = vpack.c.b16 %v1581, %v1581
    %v1614 = vpack.c.b16 %v1582, %v1582
    %v1615 = vpack.c.b16 %v1583, %v1583
    %v1616 = vpack.c.b16 %v1584, %v1584
    %v1617 = vpack.c.b16 %v1585, %v1585
    %v1618 = vpack.c.b16 %v1586, %v1586
    %v1619 = vpack.c.b16 %v1587, %v1587
    %v1620 = vpack.c.b16 %v1588, %v1588
    %v1621 = vpack.c.b16 %v1589, %v1589
    %1654 = vst [vmem:[%s7] sm:$0xf] %v1590
    %1655 = vst [vmem:[%s7 + $0x4] sm:$0xf] %v1591
    %1656 = vst [vmem:[%s7 + $0x8] sm:$0xf] %v1592
    %1657 = vst [vmem:[%s7 + $0xc] sm:$0xf] %v1593
    %1658 = vst [vmem:[%s7 + $0x10] sm:$0xf] %v1594
    %1659 = vst [vmem:[%s7 + $0x14] sm:$0xf] %v1595
    %1660 = vst [vmem:[%s7 + $0x18] sm:$0xf] %v1596
    %1661 = vst [vmem:[%s7 + $0x1c] sm:$0xf] %v1597
    %1662 = vst [vmem:[%s7 + $0x20] sm:$0xf] %v1598
    %1663 = vst [vmem:[%s7 + $0x24] sm:$0xf] %v1599
    %1664 = vst [vmem:[%s7 + $0x28] sm:$0xf] %v1600
    %1665 = vst [vmem:[%s7 + $0x2c] sm:$0xf] %v1601
    %1666 = vst [vmem:[%s7 + $0x30] sm:$0xf] %v1602
    %1667 = vst [vmem:[%s7 + $0x34] sm:$0xf] %v1603
    %1668 = vst [vmem:[%s7 + $0x38] sm:$0xf] %v1604
    %1669 = vst [vmem:[%s7 + $0x3c] sm:$0xf] %v1605
    %1670 = vst [vmem:[%s7 + $0x40] sm:$0xf] %v1606
    %1671 = vst [vmem:[%s7 + $0x44] sm:$0xf] %v1607
    %1672 = vst [vmem:[%s7 + $0x48] sm:$0xf] %v1608
    %1673 = vst [vmem:[%s7 + $0x4c] sm:$0xf] %v1609
    %1674 = vst [vmem:[%s7 + $0x50] sm:$0xf] %v1610
    %1675 = vst [vmem:[%s7 + $0x54] sm:$0xf] %v1611
    %1676 = vst [vmem:[%s7 + $0x58] sm:$0xf] %v1612
    %1677 = vst [vmem:[%s7 + $0x5c] sm:$0xf] %v1613
    %1678 = vst [vmem:[%s7 + $0x60] sm:$0xf] %v1614
    %1679 = vst [vmem:[%s7 + $0x64] sm:$0xf] %v1615
    %1680 = vst [vmem:[%s7 + $0x68] sm:$0xf] %v1616
    %1681 = vst [vmem:[%s7 + $0x6c] sm:$0xf] %v1617
    %1682 = vst [vmem:[%s7 + $0x70] sm:$0xf] %v1618
    %1683 = vst [vmem:[%s7 + $0x74] sm:$0xf] %v1619
    %1684 = vst [vmem:[%s7 + $0x78] sm:$0xf] %v1620
    %1685 = vst [vmem:[%s7 + $0x7c] sm:$0x1] %v1621
    // Predicated region
    $region34: #{feats_biaffine_forward.1} parent=1 // pred_check
      _
    $region35: #{feats_biaffine_forward.1} parent=1 // pred_check_branch
      %1687 = sbr.rel (0) target = $region37
    $region36: #{feats_biaffine_forward.1} parent=1 // pred_region
      _
    $region37: #{feats_biaffine_forward.1} parent=1 // pred_fallthru
      _
    // Predicated region
    $region38: #{feats_biaffine_forward.1} parent=1 // pred_check
      _
    $region39: #{feats_biaffine_forward.1} parent=1 // pred_check_branch
      %1689 = sbr.rel (0) target = $region41
    $region40: #{feats_biaffine_forward.1} parent=1 // pred_region
      _
    $region41: #{feats_biaffine_forward.1} parent=1 // pred_fallthru
      _
    %1690 = vsyncpa [#allocation3], 1

</llo_original>
